<compile_context>
chip_gen: v7x
topology: tpu7x:2x2x1
jax: 0.10.0
libtpu: 0.0.40
codegen_flags: <defaults>
</compile_context>

<pallas_src>
import functools

import jax
import jax.numpy as jnp
from jax.experimental import pallas as pl
from jax.experimental.pallas import tpu as pltpu


def mpnn_kernel(
    nfb_ref,      # (N, nin)        bf16  node features (for gathers)
    nft_ref,      # (nin, N)        f32   node features transposed (node MLP)
    deg_ref,      # (1, N)          f32   in-degree
    ef_ref,       # (TE, ein)       f32   edge-feature tile
    gsrc_ref,     # (TE, N)         bf16  one-hot(src) tile
    gdst_ref,     # (TE, N)         bf16  one-hot(dst) tile
    w1ef_ref, w1src_ref, w1dst_ref, b1ea_ref,   # fused edge+attn MLP layer 1 (split by input rows)
    w2bd_ref, b2bd_ref,                          # block-diag layer 2 -> (TE, D+1), last col = attn logit
    w1naT_ref, w1nnT_ref, b1nT_ref, w2nT_ref, b2nT_ref,   # node MLP (transposed weights)
    unT_ref,      # out (node_outdim, N)
    ue_ref,       # out (TE, D)
    m_sc,         # scratch (1, N)   running per-node max of logits
    s_sc,         # scratch (D+1, N) running [sum uh*ex | sum ex]^T
):
    t = pl.program_id(0)
    n_tiles = pl.num_programs(0)
    D = ue_ref.shape[1]                       # edge_outdim

    @pl.when(t == 0)
    def _init():
        m_sc[...] = jnp.full(m_sc.shape, -1e30, jnp.float32)
        s_sc[...] = jnp.zeros_like(s_sc)

    nf_bf = nfb_ref[...]                      # (N, nin) bf16
    gsrc = gsrc_ref[...]                      # (TE, N)  bf16
    gdst = gdst_ref[...]                      # (TE, N)  bf16
    ef = ef_ref[...]                          # (TE, ein) f32

    # ---- gather endpoint features on the MXU (bf16 x bf16 -> f32) --------
    sender = jnp.dot(gsrc, nf_bf, preferred_element_type=jnp.float32)    # (TE, nin)
    receiver = jnp.dot(gdst, nf_bf, preferred_element_type=jnp.float32)  # (TE, nin)

    # ---- fused edge_model + attn_model, split-weight matmuls (no concat) --
    h = (jnp.dot(ef, w1ef_ref[...], preferred_element_type=jnp.float32)
         + jnp.dot(sender, w1src_ref[...], preferred_element_type=jnp.float32)
         + jnp.dot(receiver, w1dst_ref[...], preferred_element_type=jnp.float32)
         + b1ea_ref[...])
    h = jnp.maximum(h, 0.0)                                              # (TE, 2H)
    head = jnp.dot(h, w2bd_ref[...], preferred_element_type=jnp.float32) + b2bd_ref[...]
    # head: (TE, D+1); [:, :D] = updated edge features, [:, D] = attention logit

    uh_e = head[:, :D]
    logit = head[:, D:]                                                  # (TE, 1)
    ue_ref[...] = uh_e

    # ---- online (tiled) segment softmax over destination nodes -----------
    gdst_f = gdst.astype(jnp.float32)                                    # (TE, N)
    masked = gdst_f * logit + (gdst_f - 1.0) * 1e30                      # (TE, N)
    tile_max = jnp.max(masked, axis=0, keepdims=True)                    # (1, N)
    m_old = m_sc[...]                                                    # (1, N)
    m_new = jnp.maximum(m_old, tile_max)
    alpha = jnp.exp(m_old - m_new)                                       # (1, N) rescale factor
    edge_max = jnp.sum(gdst_f * m_new, axis=1, keepdims=True)            # (TE, 1) one-hot pick
    ex = jnp.exp(logit - edge_max)                                       # (TE, 1)

    # [uh_e * ex | ex] built without a lane concat, then ONE scatter matmul
    col = jax.lax.broadcasted_iota(jnp.int32, head.shape, 1)
    msg = jnp.where(col == D, 1.0, head) * ex                            # (TE, D+1)
    contrib = jax.lax.dot_general(                                       # (D+1, N) = msg^T @ gdst
        msg.astype(jnp.bfloat16), gdst,
        dimension_numbers=(((0,), (0,)), ((), ())),
        preferred_element_type=jnp.float32)

    s_sc[...] = s_sc[...] * alpha + contrib
    m_sc[...] = m_new

    # ---- finalize: mean aggregation + node MLP (transposed) ---------------
    @pl.when(t == n_tiles - 1)
    def _finalize():
        S = s_sc[...]                                                    # (D+1, N)
        agg_t = S[:D, :]                                                 # (D, N)  sum uh*ex
        denom = S[D:, :]                                                 # (1, N)  sum ex
        deg = deg_ref[...]                                               # (1, N)
        norm = jnp.maximum(denom * jnp.maximum(deg, 1.0), 1e-30)
        agg_mt = agg_t * pl.reciprocal(norm, approx=True)                # (D, N)  mean of uh*attn

        hn = (jnp.dot(w1naT_ref[...], agg_mt, preferred_element_type=jnp.float32)
              + jnp.dot(w1nnT_ref[...], nft_ref[...], preferred_element_type=jnp.float32)
              + b1nT_ref[...])
        hn = jnp.maximum(hn, 0.0)                                        # (Hn, N)
        unT_ref[...] = (jnp.dot(w2nT_ref[...], hn, preferred_element_type=jnp.float32)
                        + b2nT_ref[...])                                 # (node_outdim, N)


def init_mlp_params(key, in_dim, hidden_dim, out_dim):
    k1, k2 = jax.random.split(key)
    w1 = jax.random.normal(k1, (in_dim, hidden_dim), jnp.float32) * 0.1
    b1 = jnp.zeros((1, hidden_dim), jnp.float32)
    w2 = jax.random.normal(k2, (hidden_dim, out_dim), jnp.float32) * 0.1
    b2 = jnp.zeros((1, out_dim), jnp.float32)
    return (w1, b1, w2, b2)


@functools.partial(jax.jit, static_argnames=("node_outdim", "edge_outdim", "edge_tile"))
def mpnn_layer(nf, ef, src, dst, edge_params, attn_params, node_params,
               *, node_outdim, edge_outdim, edge_tile=256):
    N, nin = nf.shape
    E, ein = ef.shape
    D = edge_outdim
    No = node_outdim

    te = max(8, (edge_tile // 8) * 8)                 # edge-tile rows, multiple of 8
    num_tiles = -(-E // te)
    e_pad = num_tiles * te

    # one-hot gather/scatter matrices in bf16 (0/1 are exact in bf16)
    gsrc = jax.nn.one_hot(src, N, dtype=jnp.bfloat16)   # (E, N)
    gdst = jax.nn.one_hot(dst, N, dtype=jnp.bfloat16)   # (E, N)
    pad = e_pad - E
    if pad:
        gsrc = jnp.pad(gsrc, ((0, pad), (0, 0)))        # zero rows => no-op edges
        gdst = jnp.pad(gdst, ((0, pad), (0, 0)))
        ef_p = jnp.pad(ef, ((0, pad), (0, 0)))
    else:
        ef_p = ef

    deg = jnp.zeros((1, N), jnp.float32).at[0, dst].add(1.0)   # in-degree
    nf_bf = nf.astype(jnp.bfloat16)
    nft = nf.T

    # --- weight preparation (all free, wrapper-side) -----------------------
    w1e, b1e, w2e, b2e = edge_params
    w1a, b1a, w2a, b2a = attn_params
    w1n, b1n, w2n, b2n = node_params
    He, Ha = w1e.shape[1], w1a.shape[1]
    Hn = w1n.shape[1]

    # fuse edge_model / attn_model first layers, split by input rows
    w1ea = jnp.concatenate([w1e, w1a], axis=1)                  # (ein+2nin, He+Ha)
    b1ea = jnp.concatenate([b1e, b1a], axis=1)                  # (1, He+Ha)
    w1_ef, w1_src, w1_dst = w1ea[:ein], w1ea[ein:ein + nin], w1ea[ein + nin:]
    Hea = He + Ha
    # block-diagonal second layer -> [uh_e | logit]
    w2bd = jnp.concatenate(
        [jnp.concatenate([w2e, jnp.zeros((He, 1), w2e.dtype)], axis=1),
         jnp.concatenate([jnp.zeros((Ha, D), w2a.dtype), w2a], axis=1)], axis=0)   # (Hea, D+1)
    b2bd = jnp.concatenate([b2e, b2a], axis=1)                  # (1, D+1)
    # node MLP in transposed orientation (lane-dense along N)
    w1naT = w1n[:D].T                                           # (Hn, D)
    w1nnT = w1n[D:].T                                           # (Hn, nin)
    b1nT = b1n.T                                                # (Hn, 1)
    w2nT = w2n.T                                                # (No, Hn)
    b2nT = b2n.T                                                # (No, 1)

    inputs = [nf_bf, nft, deg, ef_p, gsrc, gdst,
              w1_ef, w1_src, w1_dst, b1ea, w2bd, b2bd,
              w1naT, w1nnT, b1nT, w2nT, b2nT]

    def full(shape):
        return pl.BlockSpec(shape, lambda t: (0, 0))

    in_specs = [
        full((N, nin)),                                    # nf_bf
        full((nin, N)),                                    # nft
        full((1, N)),                                      # deg
        pl.BlockSpec((te, ein), lambda t: (t, 0)),         # ef tile
        pl.BlockSpec((te, N), lambda t: (t, 0)),           # gsrc tile
        pl.BlockSpec((te, N), lambda t: (t, 0)),           # gdst tile
        full((ein, Hea)), full((nin, Hea)), full((nin, Hea)), full((1, Hea)),
        full((Hea, D + 1)), full((1, D + 1)),
        full((Hn, D)), full((Hn, nin)), full((Hn, 1)),
        full((No, Hn)), full((No, 1)),
    ]
    out_specs = (
        pl.BlockSpec((No, N), lambda t: (0, 0)),           # unT (resident accumulator output)
        pl.BlockSpec((te, D), lambda t: (t, 0)),           # ue tile
    )
    out_shape = (
        jax.ShapeDtypeStruct((No, N), jnp.float32),
        jax.ShapeDtypeStruct((e_pad, D), jnp.float32),
    )
    scratch = [pltpu.VMEM((1, N), jnp.float32),            # running max
               pltpu.VMEM((D + 1, N), jnp.float32)]        # running [sum uh*ex | sum ex]^T

    cost = pl.CostEstimate(
        flops=int(2 * e_pad * N * (2 * nin + D + 2)
                  + 2 * e_pad * (ein + 2 * nin) * Hea + 2 * e_pad * Hea * (D + 1)
                  + 2 * N * (D + nin) * Hn + 2 * N * Hn * No),
        transcendentals=int(2 * e_pad + 2 * N * num_tiles),
        bytes_accessed=int(2 * e_pad * N * 2
                           + (e_pad * (ein + D) + N * (2 * nin + No) + Hea * (ein + 2 * nin + D + 1)
                              + Hn * (D + nin + No)) * 4),
    )

    unT, ue = pl.pallas_call(
        mpnn_kernel,
        out_shape=out_shape,
        grid_spec=pltpu.PrefetchScalarGridSpec(
            num_scalar_prefetch=0,
            grid=(num_tiles,),
            in_specs=in_specs,
            out_specs=out_specs,
            scratch_shapes=scratch),
        compiler_params=pltpu.CompilerParams(
            dimension_semantics=("arbitrary",)),   # edge axis carries the per-node reduction
        cost_estimate=cost,
    )(*inputs)

    return unT.T, ue[:E]


def mpnn_reference(nf, ef, src, dst, edge_params, attn_params, node_params):
    """Pure-JAX f32 reference with the original (unfused) math."""
    N = nf.shape[0]
    gsrc = jax.nn.one_hot(src, N, dtype=jnp.float32)
    gdst = jax.nn.one_hot(dst, N, dtype=jnp.float32)

    def mlp(x, p):
        w1, b1, w2, b2 = p
        return jnp.maximum(x @ w1 + b1, 0.0) @ w2 + b2

    sender = gsrc @ nf
    receiver = gdst @ nf
    em = jnp.concatenate([ef, sender, receiver], axis=-1)
    uh_e = mlp(em, edge_params)
    logit = mlp(em, attn_params)

    masked = jnp.where(gdst.T > 0.5, logit.T, -jnp.inf)
    dst_max = jnp.max(masked, axis=1, keepdims=True)
    dst_max = jnp.where(jnp.isfinite(dst_max), dst_max, 0.0)
    ex = jnp.exp(logit - gdst @ dst_max)
    denom = gdst.T @ ex
    attn = ex / (gdst @ denom)
    agg = gdst.T @ (uh_e * attn)
    deg = jnp.sum(gdst, axis=0, keepdims=True).T
    agg_m = agg / jnp.maximum(deg, 1.0)
    uh_n = mlp(jnp.concatenate([agg_m, nf], axis=-1), node_params)
    return uh_n, uh_e


if __name__ == "__main__":
    NODE_INDIM = 8
    EDGE_INDIM = 4
    EDGE_OUTDIM = 16
    NODE_OUTDIM = 8
    HIDDEN = 32
    N_NODES = 8
    N_EDGES = 24

    key = jax.random.PRNGKey(0)
    k_nf, k_ef, k_src, k_dst, k_e, k_a, k_n = jax.random.split(key, 7)

    nf = jax.random.normal(k_nf, (N_NODES, NODE_INDIM), jnp.float32)
    ef = jax.random.normal(k_ef, (N_EDGES, EDGE_INDIM), jnp.float32)
    src = jax.random.randint(k_src, (N_EDGES,), 0, N_NODES)
    dst = jax.random.randint(k_dst, (N_EDGES,), 0, N_NODES)

    em_in_dim = EDGE_INDIM + 2 * NODE_INDIM
    nm_in_dim = EDGE_OUTDIM + NODE_INDIM
    edge_params = init_mlp_params(k_e, em_in_dim, HIDDEN, EDGE_OUTDIM)
    attn_params = init_mlp_params(k_a, em_in_dim, HIDDEN, 1)
    node_params = init_mlp_params(k_n, nm_in_dim, HIDDEN, NODE_OUTDIM)

    updated_nf, updated_ef = mpnn_layer(
        nf, ef, src, dst, edge_params, attn_params, node_params,
        node_outdim=NODE_OUTDIM, edge_outdim=EDGE_OUTDIM, edge_tile=16)
    jax.block_until_ready((updated_nf, updated_ef))

    assert updated_nf.shape == (N_NODES, NODE_OUTDIM)
    assert updated_ef.shape == (N_EDGES, EDGE_OUTDIM)
    assert bool(jnp.all(jnp.isfinite(updated_nf))) and bool(jnp.all(jnp.isfinite(updated_ef)))

    ref_nf, ref_ef = mpnn_reference(nf, ef, src, dst, edge_params, attn_params, node_params)
    assert bool(jnp.allclose(updated_nf, ref_nf, atol=5e-2, rtol=5e-2))
    assert bool(jnp.allclose(updated_ef, ref_ef, atol=5e-2, rtol=5e-2))

    print("KERNEL_OK")
</pallas_src>

<mosaic_0001>
module attributes {stable_mosaic.version = 11 : i64} {
  func.func @mpnn_kernel(%arg0: i32, %arg1: memref<8x8xbf16, #tpu.memory_space<vmem>>, %arg2: memref<8x8xf32, #tpu.memory_space<vmem>>, %arg3: memref<1x8xf32, #tpu.memory_space<vmem>>, %arg4: memref<16x4xf32, #tpu.memory_space<vmem>>, %arg5: memref<16x8xbf16, #tpu.memory_space<vmem>>, %arg6: memref<16x8xbf16, #tpu.memory_space<vmem>>, %arg7: memref<4x64xf32, #tpu.memory_space<vmem>>, %arg8: memref<8x64xf32, #tpu.memory_space<vmem>>, %arg9: memref<8x64xf32, #tpu.memory_space<vmem>>, %arg10: memref<1x64xf32, #tpu.memory_space<vmem>>, %arg11: memref<64x17xf32, #tpu.memory_space<vmem>>, %arg12: memref<1x17xf32, #tpu.memory_space<vmem>>, %arg13: memref<32x16xf32, #tpu.memory_space<vmem>>, %arg14: memref<32x8xf32, #tpu.memory_space<vmem>>, %arg15: memref<32x1xf32, #tpu.memory_space<vmem>>, %arg16: memref<8x32xf32, #tpu.memory_space<vmem>>, %arg17: memref<8x1xf32, #tpu.memory_space<vmem>>, %arg18: memref<8x8xf32, #tpu.memory_space<vmem>>, %arg19: memref<16x16xf32, #tpu.memory_space<vmem>>, %arg20: memref<1x8xf32, #tpu.memory_space<vmem>>, %arg21: memref<17x8xf32, #tpu.memory_space<vmem>>) attributes {dimension_semantics = [#tpu.dimension_semantics<arbitrary>], iteration_bounds = array<i64: 2>, scalar_prefetch = 0 : i64, scratch_operands = 2 : i64, tpu.core_type = #tpu.core_type<tc>, window_params = [{pipeline_mode = #tpu.pipeline_mode<synchronous>, transform_indices = @transform_0, window_bounds = array<i64: 8, 8>}, {pipeline_mode = #tpu.pipeline_mode<synchronous>, transform_indices = @transform_1, window_bounds = array<i64: 8, 8>}, {pipeline_mode = #tpu.pipeline_mode<synchronous>, transform_indices = @transform_2, window_bounds = array<i64: 1, 8>}, {transform_indices = @transform_3, window_bounds = array<i64: 16, 4>}, {transform_indices = @transform_4, window_bounds = array<i64: 16, 8>}, {transform_indices = @transform_5, window_bounds = array<i64: 16, 8>}, {pipeline_mode = #tpu.pipeline_mode<synchronous>, transform_indices = @transform_6, window_bounds = array<i64: 4, 64>}, {pipeline_mode = #tpu.pipeline_mode<synchronous>, transform_indices = @transform_7, window_bounds = array<i64: 8, 64>}, {pipeline_mode = #tpu.pipeline_mode<synchronous>, transform_indices = @transform_8, window_bounds = array<i64: 8, 64>}, {pipeline_mode = #tpu.pipeline_mode<synchronous>, transform_indices = @transform_9, window_bounds = array<i64: 1, 64>}, {pipeline_mode = #tpu.pipeline_mode<synchronous>, transform_indices = @transform_10, window_bounds = array<i64: 64, 17>}, {pipeline_mode = #tpu.pipeline_mode<synchronous>, transform_indices = @transform_11, window_bounds = array<i64: 1, 17>}, {pipeline_mode = #tpu.pipeline_mode<synchronous>, transform_indices = @transform_12, window_bounds = array<i64: 32, 16>}, {pipeline_mode = #tpu.pipeline_mode<synchronous>, transform_indices = @transform_13, window_bounds = array<i64: 32, 8>}, {pipeline_mode = #tpu.pipeline_mode<synchronous>, transform_indices = @transform_14, window_bounds = array<i64: 32, 1>}, {pipeline_mode = #tpu.pipeline_mode<synchronous>, transform_indices = @transform_15, window_bounds = array<i64: 8, 32>}, {pipeline_mode = #tpu.pipeline_mode<synchronous>, transform_indices = @transform_16, window_bounds = array<i64: 8, 1>}, {pipeline_mode = #tpu.pipeline_mode<synchronous>, transform_indices = @transform_17, window_bounds = array<i64: 8, 8>}, {transform_indices = @transform_18, window_bounds = array<i64: 16, 16>}]} {
    %c0_i32 = arith.constant 0 : i32
    %0 = arith.cmpi eq, %arg0, %c0_i32 : i32
    %1 = arith.extui %0 : i1 to i32
    %c0_i32_0 = arith.constant 0 : i32
    %2 = arith.cmpi ne, %1, %c0_i32_0 : i32
    scf.if %2 {
      %cst_43 = arith.constant -1.000000e+30 : f32
      %68 = vector.broadcast %cst_43 : f32 to vector<1x8xf32>
      %c0_44 = arith.constant 0 : index
      %c0_45 = arith.constant 0 : index
      %69 = vector.load %arg20[%c0_44, %c0_45] : memref<1x8xf32, #tpu.memory_space<vmem>>, vector<1x8xf32>
      tpu.vector_store %arg20[%c0_44, %c0_45], %68 {strides = array<i32>} : memref<1x8xf32, #tpu.memory_space<vmem>>, vector<1x8xf32>,
      %cst_46 = arith.constant 0.000000e+00 : f32
      %70 = vector.broadcast %cst_46 : f32 to vector<17x8xf32>
      %c0_47 = arith.constant 0 : index
      %c0_48 = arith.constant 0 : index
      %71 = vector.load %arg21[%c0_47, %c0_48] : memref<17x8xf32, #tpu.memory_space<vmem>>, vector<17x8xf32>
      tpu.vector_store %arg21[%c0_47, %c0_48], %70 {strides = array<i32>} : memref<17x8xf32, #tpu.memory_space<vmem>>, vector<17x8xf32>,
    } else {
    }
    %c0 = arith.constant 0 : index
    %c0_1 = arith.constant 0 : index
    %3 = vector.load %arg1[%c0, %c0_1] : memref<8x8xbf16, #tpu.memory_space<vmem>>, vector<8x8xbf16>
    %c0_2 = arith.constant 0 : index
    %c0_3 = arith.constant 0 : index
    %4 = vector.load %arg5[%c0_2, %c0_3] : memref<16x8xbf16, #tpu.memory_space<vmem>>, vector<16x8xbf16>
    %c0_4 = arith.constant 0 : index
    %c0_5 = arith.constant 0 : index
    %5 = vector.load %arg6[%c0_4, %c0_5] : memref<16x8xbf16, #tpu.memory_space<vmem>>, vector<16x8xbf16>
    %c0_6 = arith.constant 0 : index
    %c0_7 = arith.constant 0 : index
    %6 = vector.load %arg4[%c0_6, %c0_7] : memref<16x4xf32, #tpu.memory_space<vmem>>, vector<16x4xf32>
    %cst = arith.constant dense<0.000000e+00> : vector<16x8xf32>
    %7 = tpu.matmul %4, %3, %cst {dimension_numbers = #tpu.dot_dimension_numbers<[1], [0], [0], [1], [0, 0, 1, 1], [], []>} : vector<16x8xbf16>, vector<8x8xbf16>, vector<16x8xf32> -> vector<16x8xf32>
    %cst_8 = arith.constant dense<0.000000e+00> : vector<16x8xf32>
    %8 = tpu.matmul %5, %3, %cst_8 {dimension_numbers = #tpu.dot_dimension_numbers<[1], [0], [0], [1], [0, 0, 1, 1], [], []>} : vector<16x8xbf16>, vector<8x8xbf16>, vector<16x8xf32> -> vector<16x8xf32>
    %c0_9 = arith.constant 0 : index
    %c0_10 = arith.constant 0 : index
    %9 = vector.load %arg7[%c0_9, %c0_10] : memref<4x64xf32, #tpu.memory_space<vmem>>, vector<4x64xf32>
    %cst_11 = arith.constant dense<0.000000e+00> : vector<16x64xf32>
    %10 = tpu.matmul %6, %9, %cst_11 {dimension_numbers = #tpu.dot_dimension_numbers<[1], [0], [0], [1], [0, 0, 1, 1], [], []>} : vector<16x4xf32>, vector<4x64xf32>, vector<16x64xf32> -> vector<16x64xf32>
    %c0_12 = arith.constant 0 : index
    %c0_13 = arith.constant 0 : index
    %11 = vector.load %arg8[%c0_12, %c0_13] : memref<8x64xf32, #tpu.memory_space<vmem>>, vector<8x64xf32>
    %cst_14 = arith.constant dense<0.000000e+00> : vector<16x64xf32>
    %12 = tpu.matmul %7, %11, %cst_14 {dimension_numbers = #tpu.dot_dimension_numbers<[1], [0], [0], [1], [0, 0, 1, 1], [], []>} : vector<16x8xf32>, vector<8x64xf32>, vector<16x64xf32> -> vector<16x64xf32>
    %13 = arith.addf %10, %12 : vector<16x64xf32>
    %c0_15 = arith.constant 0 : index
    %c0_16 = arith.constant 0 : index
    %14 = vector.load %arg9[%c0_15, %c0_16] : memref<8x64xf32, #tpu.memory_space<vmem>>, vector<8x64xf32>
    %cst_17 = arith.constant dense<0.000000e+00> : vector<16x64xf32>
    %15 = tpu.matmul %8, %14, %cst_17 {dimension_numbers = #tpu.dot_dimension_numbers<[1], [0], [0], [1], [0, 0, 1, 1], [], []>} : vector<16x8xf32>, vector<8x64xf32>, vector<16x64xf32> -> vector<16x64xf32>
    %16 = arith.addf %13, %15 : vector<16x64xf32>
    %c0_18 = arith.constant 0 : index
    %c0_19 = arith.constant 0 : index
    %17 = vector.load %arg10[%c0_18, %c0_19] : memref<1x64xf32, #tpu.memory_space<vmem>>, vector<1x64xf32>
    %18 = vector.broadcast %17 : vector<1x64xf32> to vector<16x64xf32>
    %19 = arith.addf %16, %18 : vector<16x64xf32>
    %cst_20 = arith.constant 0.000000e+00 : f32
    %20 = vector.broadcast %cst_20 : f32 to vector<16x64xf32>
    %21 = arith.maximumf %19, %20 : vector<16x64xf32>
    %c0_21 = arith.constant 0 : index
    %c0_22 = arith.constant 0 : index
    %22 = vector.load %arg11[%c0_21, %c0_22] : memref<64x17xf32, #tpu.memory_space<vmem>>, vector<64x17xf32>
    %cst_23 = arith.constant dense<0.000000e+00> : vector<16x17xf32>
    %23 = tpu.matmul %21, %22, %cst_23 {dimension_numbers = #tpu.dot_dimension_numbers<[1], [0], [0], [1], [0, 0, 1, 1], [], []>} : vector<16x64xf32>, vector<64x17xf32>, vector<16x17xf32> -> vector<16x17xf32>
    %c0_24 = arith.constant 0 : index
    %c0_25 = arith.constant 0 : index
    %24 = vector.load %arg12[%c0_24, %c0_25] : memref<1x17xf32, #tpu.memory_space<vmem>>, vector<1x17xf32>
    %25 = vector.broadcast %24 : vector<1x17xf32> to vector<16x17xf32>
    %26 = arith.addf %23, %25 : vector<16x17xf32>
    %27 = vector.extract_strided_slice %26 {offsets = [0, 0], sizes = [16, 16], strides = [1, 1]} : vector<16x17xf32> to vector<16x16xf32>
    %28 = vector.extract_strided_slice %26 {offsets = [0, 16], sizes = [16, 1], strides = [1, 1]} : vector<16x17xf32> to vector<16x1xf32>
    %c0_26 = arith.constant 0 : index
    %c0_27 = arith.constant 0 : index
    %29 = vector.load %arg19[%c0_26, %c0_27] : memref<16x16xf32, #tpu.memory_space<vmem>>, vector<16x16xf32>
    tpu.vector_store %arg19[%c0_26, %c0_27], %27 {strides = array<i32>} : memref<16x16xf32, #tpu.memory_space<vmem>>, vector<16x16xf32>,
    %30 = arith.extf %5 : vector<16x8xbf16> to vector<16x8xf32>
    %31 = vector.broadcast %28 : vector<16x1xf32> to vector<16x8xf32>
    %32 = arith.mulf %30, %31 : vector<16x8xf32>
    %cst_28 = arith.constant 1.000000e+00 : f32
    %33 = vector.broadcast %cst_28 : f32 to vector<16x8xf32>
    %34 = arith.subf %30, %33 : vector<16x8xf32>
    %cst_29 = arith.constant 1.000000e+30 : f32
    %35 = vector.broadcast %cst_29 : f32 to vector<16x8xf32>
    %36 = arith.mulf %34, %35 : vector<16x8xf32>
    %37 = arith.addf %32, %36 : vector<16x8xf32>
    %cst_30 = arith.constant dense<0xFF800000> : vector<8xf32>
    %38 = vector.multi_reduction <maximumf>, %37, %cst_30 [0] : vector<16x8xf32> to vector<8xf32>
    %39 = vector.shape_cast %38 : vector<8xf32> to vector<1x8xf32>
    %c0_31 = arith.constant 0 : index
    %c0_32 = arith.constant 0 : index
    %40 = vector.load %arg20[%c0_31, %c0_32] : memref<1x8xf32, #tpu.memory_space<vmem>>, vector<1x8xf32>
    %41 = arith.maximumf %40, %39 : vector<1x8xf32>
    %42 = arith.subf %40, %41 : vector<1x8xf32>
    %43 = math.exp %42 : vector<1x8xf32>
    %44 = vector.broadcast %41 : vector<1x8xf32> to vector<16x8xf32>
    %45 = arith.mulf %30, %44 : vector<16x8xf32>
    %cst_33 = arith.constant dense<0.000000e+00> : vector<16xf32>
    %46 = vector.multi_reduction <add>, %45, %cst_33 [1] : vector<16x8xf32> to vector<16xf32>
    %47 = vector.shape_cast %46 : vector<16xf32> to vector<16x1xf32>
    %48 = arith.subf %28, %47 : vector<16x1xf32>
    %49 = math.exp %48 : vector<16x1xf32>
    %50 = tpu.iota {dimensions = array<i32: 1>} : vector<16x17xi32>
    %c16_i32 = arith.constant 16 : i32
    %51 = vector.broadcast %c16_i32 : i32 to vector<16x17xi32>
    %52 = arith.cmpi eq, %50, %51 : vector<16x17xi32>
    %cst_34 = arith.constant 1.000000e+00 : f32
    %53 = vector.broadcast %cst_34 : f32 to vector<16x17xf32>
    %54 = arith.select %52, %53, %26 : vector<16x17xi1>, vector<16x17xf32>
    %55 = vector.broadcast %49 : vector<16x1xf32> to vector<16x17xf32>
    %56 = arith.mulf %54, %55 : vector<16x17xf32>
    %57 = arith.truncf %56 : vector<16x17xf32> to vector<16x17xbf16>
    %cst_35 = arith.constant dense<0.000000e+00> : vector<17x8xf32>
    %58 = tpu.matmul %57, %5, %cst_35 {dimension_numbers = #tpu.dot_dimension_numbers<[0], [0], [1], [1], [0, 1, 1, 1], [], []>} : vector<16x17xbf16>, vector<16x8xbf16>, vector<17x8xf32> -> vector<17x8xf32>
    %c0_36 = arith.constant 0 : index
    %c0_37 = arith.constant 0 : index
    %59 = vector.load %arg21[%c0_36, %c0_37] : memref<17x8xf32, #tpu.memory_space<vmem>>, vector<17x8xf32>
    %60 = vector.broadcast %43 : vector<1x8xf32> to vector<17x8xf32>
    %61 = arith.mulf %59, %60 : vector<17x8xf32>
    %62 = arith.addf %61, %58 : vector<17x8xf32>
    %c0_38 = arith.constant 0 : index
    %c0_39 = arith.constant 0 : index
    %63 = vector.load %arg21[%c0_38, %c0_39] : memref<17x8xf32, #tpu.memory_space<vmem>>, vector<17x8xf32>
    tpu.vector_store %arg21[%c0_38, %c0_39], %62 {strides = array<i32>} : memref<17x8xf32, #tpu.memory_space<vmem>>, vector<17x8xf32>,
    %c0_40 = arith.constant 0 : index
    %c0_41 = arith.constant 0 : index
    %64 = vector.load %arg20[%c0_40, %c0_41] : memref<1x8xf32, #tpu.memory_space<vmem>>, vector<1x8xf32>
    tpu.vector_store %arg20[%c0_40, %c0_41], %41 {strides = array<i32>} : memref<1x8xf32, #tpu.memory_space<vmem>>, vector<1x8xf32>,
    %c1_i32 = arith.constant 1 : i32
    %65 = arith.cmpi eq, %arg0, %c1_i32 : i32
    %66 = arith.extui %65 : i1 to i32
    %c0_i32_42 = arith.constant 0 : i32
    %67 = arith.cmpi ne, %66, %c0_i32_42 : i32
    scf.if %67 {
      %c0_43 = arith.constant 0 : index
      %c0_44 = arith.constant 0 : index
      %68 = vector.load %arg21[%c0_43, %c0_44] : memref<17x8xf32, #tpu.memory_space<vmem>>, vector<17x8xf32>
      %69 = vector.extract_strided_slice %68 {offsets = [0, 0], sizes = [16, 8], strides = [1, 1]} : vector<17x8xf32> to vector<16x8xf32>
      %70 = vector.extract_strided_slice %68 {offsets = [16, 0], sizes = [1, 8], strides = [1, 1]} : vector<17x8xf32> to vector<1x8xf32>
      %c0_45 = arith.constant 0 : index
      %c0_46 = arith.constant 0 : index
      %71 = vector.load %arg3[%c0_45, %c0_46] : memref<1x8xf32, #tpu.memory_space<vmem>>, vector<1x8xf32>
      %cst_47 = arith.constant 1.000000e+00 : f32
      %72 = vector.broadcast %cst_47 : f32 to vector<1x8xf32>
      %73 = arith.maximumf %71, %72 : vector<1x8xf32>
      %74 = arith.mulf %70, %73 : vector<1x8xf32>
      %cst_48 = arith.constant 1.000000e-30 : f32
      %75 = vector.broadcast %cst_48 : f32 to vector<1x8xf32>
      %76 = arith.maximumf %74, %75 : vector<1x8xf32>
      %77 = tpu.reciprocal %76 {approx = true} : vector<1x8xf32> -> vector<1x8xf32>
      %78 = vector.broadcast %77 : vector<1x8xf32> to vector<16x8xf32>
      %79 = arith.mulf %69, %78 : vector<16x8xf32>
      %c0_49 = arith.constant 0 : index
      %c0_50 = arith.constant 0 : index
      %80 = vector.load %arg13[%c0_49, %c0_50] : memref<32x16xf32, #tpu.memory_space<vmem>>, vector<32x16xf32>
      %cst_51 = arith.constant dense<0.000000e+00> : vector<32x8xf32>
      %81 = tpu.matmul %80, %79, %cst_51 {dimension_numbers = #tpu.dot_dimension_numbers<[1], [0], [0], [1], [0, 0, 1, 1], [], []>} : vector<32x16xf32>, vector<16x8xf32>, vector<32x8xf32> -> vector<32x8xf32>
      %c0_52 = arith.constant 0 : index
      %c0_53 = arith.constant 0 : index
      %82 = vector.load %arg14[%c0_52, %c0_53] : memref<32x8xf32, #tpu.memory_space<vmem>>, vector<32x8xf32>
      %c0_54 = arith.constant 0 : index
      %c0_55 = arith.constant 0 : index
      %83 = vector.load %arg2[%c0_54, %c0_55] : memref<8x8xf32, #tpu.memory_space<vmem>>, vector<8x8xf32>
      %cst_56 = arith.constant dense<0.000000e+00> : vector<32x8xf32>
      %84 = tpu.matmul %82, %83, %cst_56 {dimension_numbers = #tpu.dot_dimension_numbers<[1], [0], [0], [1], [0, 0, 1, 1], [], []>} : vector<32x8xf32>, vector<8x8xf32>, vector<32x8xf32> -> vector<32x8xf32>
      %85 = arith.addf %81, %84 : vector<32x8xf32>
      %c0_57 = arith.constant 0 : index
      %c0_58 = arith.constant 0 : index
      %86 = vector.load %arg15[%c0_57, %c0_58] : memref<32x1xf32, #tpu.memory_space<vmem>>, vector<32x1xf32>
      %87 = vector.broadcast %86 : vector<32x1xf32> to vector<32x8xf32>
      %88 = arith.addf %85, %87 : vector<32x8xf32>
      %cst_59 = arith.constant 0.000000e+00 : f32
      %89 = vector.broadcast %cst_59 : f32 to vector<32x8xf32>
      %90 = arith.maximumf %88, %89 : vector<32x8xf32>
      %c0_60 = arith.constant 0 : index
      %c0_61 = arith.constant 0 : index
      %91 = vector.load %arg16[%c0_60, %c0_61] : memref<8x32xf32, #tpu.memory_space<vmem>>, vector<8x32xf32>
      %cst_62 = arith.constant dense<0.000000e+00> : vector<8x8xf32>
      %92 = tpu.matmul %91, %90, %cst_62 {dimension_numbers = #tpu.dot_dimension_numbers<[1], [0], [0], [1], [0, 0, 1, 1], [], []>} : vector<8x32xf32>, vector<32x8xf32>, vector<8x8xf32> -> vector<8x8xf32>
      %c0_63 = arith.constant 0 : index
      %c0_64 = arith.constant 0 : index
      %93 = vector.load %arg17[%c0_63, %c0_64] : memref<8x1xf32, #tpu.memory_space<vmem>>, vector<8x1xf32>
      %94 = vector.broadcast %93 : vector<8x1xf32> to vector<8x8xf32>
      %95 = arith.addf %92, %94 : vector<8x8xf32>
      %c0_65 = arith.constant 0 : index
      %c0_66 = arith.constant 0 : index
      %96 = vector.load %arg18[%c0_65, %c0_66] : memref<8x8xf32, #tpu.memory_space<vmem>>, vector<8x8xf32>
      tpu.vector_store %arg18[%c0_65, %c0_66], %95 {strides = array<i32>} : memref<8x8xf32, #tpu.memory_space<vmem>>, vector<8x8xf32>,
    } else {
    }
    return
  }
  func.func @transform_0(%arg0: i32) -> (i32, i32) {
    %c0_i32 = arith.constant 0 : i32
    %c0_i32_0 = arith.constant 0 : i32
    %c0_i32_1 = arith.constant 0 : i32
    return %c0_i32, %c0_i32_0 : i32, i32
  }
  func.func @transform_1(%arg0: i32) -> (i32, i32) {
    %c0_i32 = arith.constant 0 : i32
    %c0_i32_0 = arith.constant 0 : i32
    %c0_i32_1 = arith.constant 0 : i32
    return %c0_i32, %c0_i32_0 : i32, i32
  }
  func.func @transform_2(%arg0: i32) -> (i32, i32) {
    %c0_i32 = arith.constant 0 : i32
    %c0_i32_0 = arith.constant 0 : i32
    %c0_i32_1 = arith.constant 0 : i32
    return %c0_i32, %c0_i32_0 : i32, i32
  }
  func.func @transform_3(%arg0: i32) -> (i32, i32) {
    %c0_i32 = arith.constant 0 : i32
    %c0_i32_0 = arith.constant 0 : i32
    return %arg0, %c0_i32 : i32, i32
  }
  func.func @transform_4(%arg0: i32) -> (i32, i32) {
    %c0_i32 = arith.constant 0 : i32
    %c0_i32_0 = arith.constant 0 : i32
    return %arg0, %c0_i32 : i32, i32
  }
  func.func @transform_5(%arg0: i32) -> (i32, i32) {
    %c0_i32 = arith.constant 0 : i32
    %c0_i32_0 = arith.constant 0 : i32
    return %arg0, %c0_i32 : i32, i32
  }
  func.func @transform_6(%arg0: i32) -> (i32, i32) {
    %c0_i32 = arith.constant 0 : i32
    %c0_i32_0 = arith.constant 0 : i32
    %c0_i32_1 = arith.constant 0 : i32
    return %c0_i32, %c0_i32_0 : i32, i32
  }
  func.func @transform_7(%arg0: i32) -> (i32, i32) {
    %c0_i32 = arith.constant 0 : i32
    %c0_i32_0 = arith.constant 0 : i32
    %c0_i32_1 = arith.constant 0 : i32
    return %c0_i32, %c0_i32_0 : i32, i32
  }
  func.func @transform_8(%arg0: i32) -> (i32, i32) {
    %c0_i32 = arith.constant 0 : i32
    %c0_i32_0 = arith.constant 0 : i32
    %c0_i32_1 = arith.constant 0 : i32
    return %c0_i32, %c0_i32_0 : i32, i32
  }
  func.func @transform_9(%arg0: i32) -> (i32, i32) {
    %c0_i32 = arith.constant 0 : i32
    %c0_i32_0 = arith.constant 0 : i32
    %c0_i32_1 = arith.constant 0 : i32
    return %c0_i32, %c0_i32_0 : i32, i32
  }
  func.func @transform_10(%arg0: i32) -> (i32, i32) {
    %c0_i32 = arith.constant 0 : i32
    %c0_i32_0 = arith.constant 0 : i32
    %c0_i32_1 = arith.constant 0 : i32
    return %c0_i32, %c0_i32_0 : i32, i32
  }
  func.func @transform_11(%arg0: i32) -> (i32, i32) {
    %c0_i32 = arith.constant 0 : i32
    %c0_i32_0 = arith.constant 0 : i32
    %c0_i32_1 = arith.constant 0 : i32
    return %c0_i32, %c0_i32_0 : i32, i32
  }
  func.func @transform_12(%arg0: i32) -> (i32, i32) {
    %c0_i32 = arith.constant 0 : i32
    %c0_i32_0 = arith.constant 0 : i32
    %c0_i32_1 = arith.constant 0 : i32
    return %c0_i32, %c0_i32_0 : i32, i32
  }
  func.func @transform_13(%arg0: i32) -> (i32, i32) {
    %c0_i32 = arith.constant 0 : i32
    %c0_i32_0 = arith.constant 0 : i32
    %c0_i32_1 = arith.constant 0 : i32
    return %c0_i32, %c0_i32_0 : i32, i32
  }
  func.func @transform_14(%arg0: i32) -> (i32, i32) {
    %c0_i32 = arith.constant 0 : i32
    %c0_i32_0 = arith.constant 0 : i32
    %c0_i32_1 = arith.constant 0 : i32
    return %c0_i32, %c0_i32_0 : i32, i32
  }
  func.func @transform_15(%arg0: i32) -> (i32, i32) {
    %c0_i32 = arith.constant 0 : i32
    %c0_i32_0 = arith.constant 0 : i32
    %c0_i32_1 = arith.constant 0 : i32
    return %c0_i32, %c0_i32_0 : i32, i32
  }
  func.func @transform_16(%arg0: i32) -> (i32, i32) {
    %c0_i32 = arith.constant 0 : i32
    %c0_i32_0 = arith.constant 0 : i32
    %c0_i32_1 = arith.constant 0 : i32
    return %c0_i32, %c0_i32_0 : i32, i32
  }
  func.func @transform_17(%arg0: i32) -> (i32, i32) {
    %c0_i32 = arith.constant 0 : i32
    %c0_i32_0 = arith.constant 0 : i32
    %c0_i32_1 = arith.constant 0 : i32
    return %c0_i32, %c0_i32_0 : i32, i32
  }
  func.func @transform_18(%arg0: i32) -> (i32, i32) {
    %c0_i32 = arith.constant 0 : i32
    %c0_i32_0 = arith.constant 0 : i32
    return %arg0, %c0_i32 : i32, i32
  }
}

</mosaic_0001>

<llo_original>
// kernel: mpnn_layer.1
$region0: #{mpnn_layer.1}
  #allocation0 [shape = 'u32[]', space=smem, size = 0x4, offset = 0x4, fixed_abs, tag = 'smem constant byte address 0x4 - core index']
  #allocation1 [shape = 'u32[144,128]{1,0:T(1,128)}', space=vmem, size = 0x12000, scoped, tag = 'internal scratch']
  #allocation2 [shape = 'f32[1,8]{1,0:T(1,128)}', space=vmem, size = 0x200, scoped, tag = 'scratch operand']
  #allocation3 [shape = 'f32[17,8]{1,0:T(8,128)}', space=vmem, size = 0x3000, scoped, tag = 'scratch operand']
  %s0 = inlined_call_operand.vmem [shape: bf16[8,8], index: 0, kind: input, shape index: {}]
  %s1 = inlined_call_operand.vmem [shape: f32[8,8], index: 1, kind: input, shape index: {}]
  %s2 = inlined_call_operand.vmem [shape: f32[1,8], index: 2, kind: input, shape index: {}]
  %s3 = inlined_call_operand.vmem [shape: f32[32,4], index: 3, kind: input, shape index: {}]
  %s4 = inlined_call_operand.vmem [shape: bf16[32,8], index: 4, kind: input, shape index: {}]
  %s5 = inlined_call_operand.vmem [shape: bf16[32,8], index: 5, kind: input, shape index: {}]
  %s6 = inlined_call_operand.vmem [shape: f32[4,64], index: 6, kind: input, shape index: {}]
  %s7 = inlined_call_operand.vmem [shape: f32[8,64], index: 7, kind: input, shape index: {}]
  %s8 = inlined_call_operand.vmem [shape: f32[8,64], index: 8, kind: input, shape index: {}]
  %s9 = inlined_call_operand.vmem [shape: f32[1,64], index: 9, kind: input, shape index: {}]
  %s10 = inlined_call_operand.vmem [shape: f32[64,17], index: 10, kind: input, shape index: {}]
  %s11 = inlined_call_operand.vmem [shape: f32[1,17], index: 11, kind: input, shape index: {}]
  %s12 = inlined_call_operand.vmem [shape: f32[32,16], index: 12, kind: input, shape index: {}]
  %s13 = inlined_call_operand.vmem [shape: f32[32,8], index: 13, kind: input, shape index: {}]
  %s14 = inlined_call_operand.vmem [shape: f32[32,1], index: 14, kind: input, shape index: {}]
  %s15 = inlined_call_operand.vmem [shape: f32[8,32], index: 15, kind: input, shape index: {}]
  %s16 = inlined_call_operand.vmem [shape: f32[8,1], index: 16, kind: input, shape index: {}]
  %s17 = inlined_call_operand.vmem [shape: f32[8,8], index: 17, kind: output, shape index: {0}]
  %s18 = inlined_call_operand.vmem [shape: f32[32,16], index: 18, kind: output, shape index: {1}]
  %19 = xla_tuple %s17, %s18
  %s20 = sld [smem:[#allocation0]]
  $region117: #{mpnn_layer.1} parent=0
    _
  %s22 = ssub.s32 1, %s20
  %s23 = scalar_select 0, %s22, %s20
  loop: start=0, step=1, limit=4
  $region2: #{mpnn_layer.1} parent=0 // loop_pre_header
    _
  $region3: #{mpnn_layer.1} parent=0 // loop_header
    %s25 = sphi 0, %s29
    %p26 = scmp.ge.s32.totalorder %s25, 4
    %s33 = sphi 0, %s33
    %s35 = sphi 0, %s33
    %s36 = sphi 0, %s35
    %s50 = sphi 0, %s36
    %s54 = sphi 0, %s54
    %s56 = sphi 0, %s54
    %s57 = sphi 0, %s56
    %s71 = sphi 0, %s57
    %s75 = sphi 0, %s75
    %s77 = sphi 0, %s75
    %s78 = sphi 0, %s77
    %s92 = sphi 0, %s78
    %s98 = sphi 0, %s100
    %s101 = sphi 0, %s98
    %s102 = sphi 0, %s101
    %s118 = sphi 0, %s102
    %s124 = sphi 0, %s126
    %s127 = sphi 0, %s124
    %s128 = sphi 0, %s127
    %s144 = sphi 0, %s128
    %s150 = sphi 0, %s152
    %s153 = sphi 0, %s150
    %s154 = sphi 0, %s153
    %s170 = sphi 0, %s154
    %s174 = sphi 0, %s174
    %s176 = sphi 0, %s174
    %s177 = sphi 0, %s176
    %s191 = sphi 0, %s177
    %s195 = sphi 0, %s195
    %s197 = sphi 0, %s195
    %s198 = sphi 0, %s197
    %s212 = sphi 0, %s198
    %s216 = sphi 0, %s216
    %s218 = sphi 0, %s216
    %s219 = sphi 0, %s218
    %s233 = sphi 0, %s219
    %s237 = sphi 0, %s237
    %s239 = sphi 0, %s237
    %s240 = sphi 0, %s239
    %s254 = sphi 0, %s240
    %s258 = sphi 0, %s258
    %s260 = sphi 0, %s258
    %s261 = sphi 0, %s260
    %s275 = sphi 0, %s261
    %s279 = sphi 0, %s279
    %s281 = sphi 0, %s279
    %s282 = sphi 0, %s281
    %s296 = sphi 0, %s282
    %s300 = sphi 0, %s300
    %s302 = sphi 0, %s300
    %s303 = sphi 0, %s302
    %s317 = sphi 0, %s303
    %s321 = sphi 0, %s321
    %s323 = sphi 0, %s321
    %s324 = sphi 0, %s323
    %s338 = sphi 0, %s324
    %s342 = sphi 0, %s342
    %s344 = sphi 0, %s342
    %s345 = sphi 0, %s344
    %s359 = sphi 0, %s345
    %s363 = sphi 0, %s363
    %s365 = sphi 0, %s363
    %s366 = sphi 0, %s365
    %s380 = sphi 0, %s366
    %s384 = sphi 0, %s384
    %s386 = sphi 0, %s384
    %s387 = sphi 0, %s386
    %s401 = sphi 0, %s387
    %s405 = sphi 0, %s405
    %s407 = sphi 0, %s405
    %s408 = sphi 0, %s407
    %s422 = sphi 0, %s408
    %s428 = sphi 0, %s430
    %s431 = sphi 0, %s428
    %s432 = sphi 0, %s431
    %s448 = sphi 0, %s432
  $region4: #{mpnn_layer.1} parent=0 // loop_header_branch
    %28 = sbr.rel (%p26) target = $region8
  $region5: #{mpnn_layer.1} parent=0 // loop_body
    %s30 = ssub.s32 %s25, 1
    %s31 = ssub.s32 %s25, 2
    %s32 = sadd.s32 %s25, 1
    %s34 = sadd.s32 %s33, 1
    %p37 = scmp.eq.s32.totalorder %s25, 1
    %p38 = scmp.ne.s32.totalorder %s33, %s35
    %p39 = scmp.eq.s32.totalorder %s25, 0
    %p40 = por %p38, %p39
    %p41 = scmp.ne.s32.totalorder %s33, %s35
    %p42 = scmp.eq.s32.totalorder %s30, 1
    %p43 = por %p41, %p42
    %p44 = scmp.ne.s32.totalorder %s35, %s36
    %p45 = scmp.eq.s32.totalorder %s30, 0
    %p46 = por %p44, %p45
    %p47 = scmp.ne.s32.totalorder %s35, %s36
    %p48 = scmp.eq.s32.totalorder %s31, 1
    %p49 = por %p47, %p48
    %p51 = scmp.ne.s32.totalorder %s36, %s50
    %p52 = scmp.eq.s32.totalorder %s31, 0
    %p53 = por %p51, %p52
    %s55 = sadd.s32 %s54, 1
    %p58 = scmp.eq.s32.totalorder %s25, 1
    %p59 = scmp.ne.s32.totalorder %s54, %s56
    %p60 = scmp.eq.s32.totalorder %s25, 0
    %p61 = por %p59, %p60
    %p62 = scmp.ne.s32.totalorder %s54, %s56
    %p63 = scmp.eq.s32.totalorder %s30, 1
    %p64 = por %p62, %p63
    %p65 = scmp.ne.s32.totalorder %s56, %s57
    %p66 = scmp.eq.s32.totalorder %s30, 0
    %p67 = por %p65, %p66
    %p68 = scmp.ne.s32.totalorder %s56, %s57
    %p69 = scmp.eq.s32.totalorder %s31, 1
    %p70 = por %p68, %p69
    %p72 = scmp.ne.s32.totalorder %s57, %s71
    %p73 = scmp.eq.s32.totalorder %s31, 0
    %p74 = por %p72, %p73
    %s76 = sadd.s32 %s75, 1
    %p79 = scmp.eq.s32.totalorder %s25, 1
    %p80 = scmp.ne.s32.totalorder %s75, %s77
    %p81 = scmp.eq.s32.totalorder %s25, 0
    %p82 = por %p80, %p81
    %p83 = scmp.ne.s32.totalorder %s75, %s77
    %p84 = scmp.eq.s32.totalorder %s30, 1
    %p85 = por %p83, %p84
    %p86 = scmp.ne.s32.totalorder %s77, %s78
    %p87 = scmp.eq.s32.totalorder %s30, 0
    %p88 = por %p86, %p87
    %p89 = scmp.ne.s32.totalorder %s77, %s78
    %p90 = scmp.eq.s32.totalorder %s31, 1
    %p91 = por %p89, %p90
    %p93 = scmp.ne.s32.totalorder %s78, %s92
    %p94 = scmp.eq.s32.totalorder %s31, 0
    %p95 = por %p93, %p94
    %s96 = ssub.s32 %s25, %s32
    %p97 = scmp.eq.s32.totalorder %s96, 0
    %s99 = sadd.s32 %s98, 1
    %s100 = scalar_select %p97, %s98, %s99
    %p103 = pneg %p97
    %p104 = scmp.eq.s32.totalorder %s25, 1
    %p105 = por %p103, %p104
    %p106 = scmp.ne.s32.totalorder %s98, %s101
    %p107 = scmp.eq.s32.totalorder %s25, 0
    %p108 = por %p106, %p107
    %p109 = scmp.ne.s32.totalorder %s98, %s101
    %p110 = scmp.eq.s32.totalorder %s30, 1
    %p111 = por %p109, %p110
    %p112 = scmp.ne.s32.totalorder %s101, %s102
    %p113 = scmp.eq.s32.totalorder %s30, 0
    %p114 = por %p112, %p113
    %p115 = scmp.ne.s32.totalorder %s101, %s102
    %p116 = scmp.eq.s32.totalorder %s31, 1
    %p117 = por %p115, %p116
    %p119 = scmp.ne.s32.totalorder %s102, %s118
    %p120 = scmp.eq.s32.totalorder %s31, 0
    %p121 = por %p119, %p120
    %s122 = ssub.s32 %s25, %s32
    %p123 = scmp.eq.s32.totalorder %s122, 0
    %s125 = sadd.s32 %s124, 1
    %s126 = scalar_select %p123, %s124, %s125
    %p129 = pneg %p123
    %p130 = scmp.eq.s32.totalorder %s25, 1
    %p131 = por %p129, %p130
    %p132 = scmp.ne.s32.totalorder %s124, %s127
    %p133 = scmp.eq.s32.totalorder %s25, 0
    %p134 = por %p132, %p133
    %p135 = scmp.ne.s32.totalorder %s124, %s127
    %p136 = scmp.eq.s32.totalorder %s30, 1
    %p137 = por %p135, %p136
    %p138 = scmp.ne.s32.totalorder %s127, %s128
    %p139 = scmp.eq.s32.totalorder %s30, 0
    %p140 = por %p138, %p139
    %p141 = scmp.ne.s32.totalorder %s127, %s128
    %p142 = scmp.eq.s32.totalorder %s31, 1
    %p143 = por %p141, %p142
    %p145 = scmp.ne.s32.totalorder %s128, %s144
    %p146 = scmp.eq.s32.totalorder %s31, 0
    %p147 = por %p145, %p146
    %s148 = ssub.s32 %s25, %s32
    %p149 = scmp.eq.s32.totalorder %s148, 0
    %s151 = sadd.s32 %s150, 1
    %s152 = scalar_select %p149, %s150, %s151
    %p155 = pneg %p149
    %p156 = scmp.eq.s32.totalorder %s25, 1
    %p157 = por %p155, %p156
    %p158 = scmp.ne.s32.totalorder %s150, %s153
    %p159 = scmp.eq.s32.totalorder %s25, 0
    %p160 = por %p158, %p159
    %p161 = scmp.ne.s32.totalorder %s150, %s153
    %p162 = scmp.eq.s32.totalorder %s30, 1
    %p163 = por %p161, %p162
    %p164 = scmp.ne.s32.totalorder %s153, %s154
    %p165 = scmp.eq.s32.totalorder %s30, 0
    %p166 = por %p164, %p165
    %p167 = scmp.ne.s32.totalorder %s153, %s154
    %p168 = scmp.eq.s32.totalorder %s31, 1
    %p169 = por %p167, %p168
    %p171 = scmp.ne.s32.totalorder %s154, %s170
    %p172 = scmp.eq.s32.totalorder %s31, 0
    %p173 = por %p171, %p172
    %s175 = sadd.s32 %s174, 1
    %p178 = scmp.eq.s32.totalorder %s25, 1
    %p179 = scmp.ne.s32.totalorder %s174, %s176
    %p180 = scmp.eq.s32.totalorder %s25, 0
    %p181 = por %p179, %p180
    %p182 = scmp.ne.s32.totalorder %s174, %s176
    %p183 = scmp.eq.s32.totalorder %s30, 1
    %p184 = por %p182, %p183
    %p185 = scmp.ne.s32.totalorder %s176, %s177
    %p186 = scmp.eq.s32.totalorder %s30, 0
    %p187 = por %p185, %p186
    %p188 = scmp.ne.s32.totalorder %s176, %s177
    %p189 = scmp.eq.s32.totalorder %s31, 1
    %p190 = por %p188, %p189
    %p192 = scmp.ne.s32.totalorder %s177, %s191
    %p193 = scmp.eq.s32.totalorder %s31, 0
    %p194 = por %p192, %p193
    %s196 = sadd.s32 %s195, 1
    %p199 = scmp.eq.s32.totalorder %s25, 1
    %p200 = scmp.ne.s32.totalorder %s195, %s197
    %p201 = scmp.eq.s32.totalorder %s25, 0
    %p202 = por %p200, %p201
    %p203 = scmp.ne.s32.totalorder %s195, %s197
    %p204 = scmp.eq.s32.totalorder %s30, 1
    %p205 = por %p203, %p204
    %p206 = scmp.ne.s32.totalorder %s197, %s198
    %p207 = scmp.eq.s32.totalorder %s30, 0
    %p208 = por %p206, %p207
    %p209 = scmp.ne.s32.totalorder %s197, %s198
    %p210 = scmp.eq.s32.totalorder %s31, 1
    %p211 = por %p209, %p210
    %p213 = scmp.ne.s32.totalorder %s198, %s212
    %p214 = scmp.eq.s32.totalorder %s31, 0
    %p215 = por %p213, %p214
    %s217 = sadd.s32 %s216, 1
    %p220 = scmp.eq.s32.totalorder %s25, 1
    %p221 = scmp.ne.s32.totalorder %s216, %s218
    %p222 = scmp.eq.s32.totalorder %s25, 0
    %p223 = por %p221, %p222
    %p224 = scmp.ne.s32.totalorder %s216, %s218
    %p225 = scmp.eq.s32.totalorder %s30, 1
    %p226 = por %p224, %p225
    %p227 = scmp.ne.s32.totalorder %s218, %s219
    %p228 = scmp.eq.s32.totalorder %s30, 0
    %p229 = por %p227, %p228
    %p230 = scmp.ne.s32.totalorder %s218, %s219
    %p231 = scmp.eq.s32.totalorder %s31, 1
    %p232 = por %p230, %p231
    %p234 = scmp.ne.s32.totalorder %s219, %s233
    %p235 = scmp.eq.s32.totalorder %s31, 0
    %p236 = por %p234, %p235
    %s238 = sadd.s32 %s237, 1
    %p241 = scmp.eq.s32.totalorder %s25, 1
    %p242 = scmp.ne.s32.totalorder %s237, %s239
    %p243 = scmp.eq.s32.totalorder %s25, 0
    %p244 = por %p242, %p243
    %p245 = scmp.ne.s32.totalorder %s237, %s239
    %p246 = scmp.eq.s32.totalorder %s30, 1
    %p247 = por %p245, %p246
    %p248 = scmp.ne.s32.totalorder %s239, %s240
    %p249 = scmp.eq.s32.totalorder %s30, 0
    %p250 = por %p248, %p249
    %p251 = scmp.ne.s32.totalorder %s239, %s240
    %p252 = scmp.eq.s32.totalorder %s31, 1
    %p253 = por %p251, %p252
    %p255 = scmp.ne.s32.totalorder %s240, %s254
    %p256 = scmp.eq.s32.totalorder %s31, 0
    %p257 = por %p255, %p256
    %s259 = sadd.s32 %s258, 1
    %p262 = scmp.eq.s32.totalorder %s25, 1
    %p263 = scmp.ne.s32.totalorder %s258, %s260
    %p264 = scmp.eq.s32.totalorder %s25, 0
    %p265 = por %p263, %p264
    %p266 = scmp.ne.s32.totalorder %s258, %s260
    %p267 = scmp.eq.s32.totalorder %s30, 1
    %p268 = por %p266, %p267
    %p269 = scmp.ne.s32.totalorder %s260, %s261
    %p270 = scmp.eq.s32.totalorder %s30, 0
    %p271 = por %p269, %p270
    %p272 = scmp.ne.s32.totalorder %s260, %s261
    %p273 = scmp.eq.s32.totalorder %s31, 1
    %p274 = por %p272, %p273
    %p276 = scmp.ne.s32.totalorder %s261, %s275
    %p277 = scmp.eq.s32.totalorder %s31, 0
    %p278 = por %p276, %p277
    %s280 = sadd.s32 %s279, 1
    %p283 = scmp.eq.s32.totalorder %s25, 1
    %p284 = scmp.ne.s32.totalorder %s279, %s281
    %p285 = scmp.eq.s32.totalorder %s25, 0
    %p286 = por %p284, %p285
    %p287 = scmp.ne.s32.totalorder %s279, %s281
    %p288 = scmp.eq.s32.totalorder %s30, 1
    %p289 = por %p287, %p288
    %p290 = scmp.ne.s32.totalorder %s281, %s282
    %p291 = scmp.eq.s32.totalorder %s30, 0
    %p292 = por %p290, %p291
    %p293 = scmp.ne.s32.totalorder %s281, %s282
    %p294 = scmp.eq.s32.totalorder %s31, 1
    %p295 = por %p293, %p294
    %p297 = scmp.ne.s32.totalorder %s282, %s296
    %p298 = scmp.eq.s32.totalorder %s31, 0
    %p299 = por %p297, %p298
    %s301 = sadd.s32 %s300, 1
    %p304 = scmp.eq.s32.totalorder %s25, 1
    %p305 = scmp.ne.s32.totalorder %s300, %s302
    %p306 = scmp.eq.s32.totalorder %s25, 0
    %p307 = por %p305, %p306
    %p308 = scmp.ne.s32.totalorder %s300, %s302
    %p309 = scmp.eq.s32.totalorder %s30, 1
    %p310 = por %p308, %p309
    %p311 = scmp.ne.s32.totalorder %s302, %s303
    %p312 = scmp.eq.s32.totalorder %s30, 0
    %p313 = por %p311, %p312
    %p314 = scmp.ne.s32.totalorder %s302, %s303
    %p315 = scmp.eq.s32.totalorder %s31, 1
    %p316 = por %p314, %p315
    %p318 = scmp.ne.s32.totalorder %s303, %s317
    %p319 = scmp.eq.s32.totalorder %s31, 0
    %p320 = por %p318, %p319
    %s322 = sadd.s32 %s321, 1
    %p325 = scmp.eq.s32.totalorder %s25, 1
    %p326 = scmp.ne.s32.totalorder %s321, %s323
    %p327 = scmp.eq.s32.totalorder %s25, 0
    %p328 = por %p326, %p327
    %p329 = scmp.ne.s32.totalorder %s321, %s323
    %p330 = scmp.eq.s32.totalorder %s30, 1
    %p331 = por %p329, %p330
    %p332 = scmp.ne.s32.totalorder %s323, %s324
    %p333 = scmp.eq.s32.totalorder %s30, 0
    %p334 = por %p332, %p333
    %p335 = scmp.ne.s32.totalorder %s323, %s324
    %p336 = scmp.eq.s32.totalorder %s31, 1
    %p337 = por %p335, %p336
    %p339 = scmp.ne.s32.totalorder %s324, %s338
    %p340 = scmp.eq.s32.totalorder %s31, 0
    %p341 = por %p339, %p340
    %s343 = sadd.s32 %s342, 1
    %p346 = scmp.eq.s32.totalorder %s25, 1
    %p347 = scmp.ne.s32.totalorder %s342, %s344
    %p348 = scmp.eq.s32.totalorder %s25, 0
    %p349 = por %p347, %p348
    %p350 = scmp.ne.s32.totalorder %s342, %s344
    %p351 = scmp.eq.s32.totalorder %s30, 1
    %p352 = por %p350, %p351
    %p353 = scmp.ne.s32.totalorder %s344, %s345
    %p354 = scmp.eq.s32.totalorder %s30, 0
    %p355 = por %p353, %p354
    %p356 = scmp.ne.s32.totalorder %s344, %s345
    %p357 = scmp.eq.s32.totalorder %s31, 1
    %p358 = por %p356, %p357
    %p360 = scmp.ne.s32.totalorder %s345, %s359
    %p361 = scmp.eq.s32.totalorder %s31, 0
    %p362 = por %p360, %p361
    %s364 = sadd.s32 %s363, 1
    %p367 = scmp.eq.s32.totalorder %s25, 1
    %p368 = scmp.ne.s32.totalorder %s363, %s365
    %p369 = scmp.eq.s32.totalorder %s25, 0
    %p370 = por %p368, %p369
    %p371 = scmp.ne.s32.totalorder %s363, %s365
    %p372 = scmp.eq.s32.totalorder %s30, 1
    %p373 = por %p371, %p372
    %p374 = scmp.ne.s32.totalorder %s365, %s366
    %p375 = scmp.eq.s32.totalorder %s30, 0
    %p376 = por %p374, %p375
    %p377 = scmp.ne.s32.totalorder %s365, %s366
    %p378 = scmp.eq.s32.totalorder %s31, 1
    %p379 = por %p377, %p378
    %p381 = scmp.ne.s32.totalorder %s366, %s380
    %p382 = scmp.eq.s32.totalorder %s31, 0
    %p383 = por %p381, %p382
    %s385 = sadd.s32 %s384, 1
    %p388 = scmp.eq.s32.totalorder %s25, 1
    %p389 = scmp.ne.s32.totalorder %s384, %s386
    %p390 = scmp.eq.s32.totalorder %s25, 0
    %p391 = por %p389, %p390
    %p392 = scmp.ne.s32.totalorder %s384, %s386
    %p393 = scmp.eq.s32.totalorder %s30, 1
    %p394 = por %p392, %p393
    %p395 = scmp.ne.s32.totalorder %s386, %s387
    %p396 = scmp.eq.s32.totalorder %s30, 0
    %p397 = por %p395, %p396
    %p398 = scmp.ne.s32.totalorder %s386, %s387
    %p399 = scmp.eq.s32.totalorder %s31, 1
    %p400 = por %p398, %p399
    %p402 = scmp.ne.s32.totalorder %s387, %s401
    %p403 = scmp.eq.s32.totalorder %s31, 0
    %p404 = por %p402, %p403
    %s406 = sadd.s32 %s405, 1
    %p409 = scmp.eq.s32.totalorder %s25, 1
    %p410 = scmp.ne.s32.totalorder %s405, %s407
    %p411 = scmp.eq.s32.totalorder %s25, 0
    %p412 = por %p410, %p411
    %p413 = scmp.ne.s32.totalorder %s405, %s407
    %p414 = scmp.eq.s32.totalorder %s30, 1
    %p415 = por %p413, %p414
    %p416 = scmp.ne.s32.totalorder %s407, %s408
    %p417 = scmp.eq.s32.totalorder %s30, 0
    %p418 = por %p416, %p417
    %p419 = scmp.ne.s32.totalorder %s407, %s408
    %p420 = scmp.eq.s32.totalorder %s31, 1
    %p421 = por %p419, %p420
    %p423 = scmp.ne.s32.totalorder %s408, %s422
    %p424 = scmp.eq.s32.totalorder %s31, 0
    %p425 = por %p423, %p424
    %s426 = ssub.s32 %s25, %s32
    %p427 = scmp.eq.s32.totalorder %s426, 0
    %s429 = sadd.s32 %s428, 1
    %s430 = scalar_select %p427, %s428, %s429
    %p433 = pneg %p427
    %p434 = scmp.eq.s32.totalorder %s25, 1
    %p435 = por %p433, %p434
    %p436 = scmp.ne.s32.totalorder %s428, %s431
    %p437 = scmp.eq.s32.totalorder %s25, 0
    %p438 = por %p436, %p437
    %p439 = scmp.ne.s32.totalorder %s428, %s431
    %p440 = scmp.eq.s32.totalorder %s30, 1
    %p441 = por %p439, %p440
    %p442 = scmp.ne.s32.totalorder %s431, %s432
    %p443 = scmp.eq.s32.totalorder %s30, 0
    %p444 = por %p442, %p443
    %p445 = scmp.ne.s32.totalorder %s431, %s432
    %p446 = scmp.eq.s32.totalorder %s31, 1
    %p447 = por %p445, %p446
    %p449 = scmp.ne.s32.totalorder %s432, %s448
    %p450 = scmp.eq.s32.totalorder %s31, 0
    %p451 = por %p449, %p450
    %p452 = scmp.le.s32.totalorder 1, %s25
    %p453 = scmp.lt.s32.totalorder %s25, 3
    %p454 = pnand %p452, %p453
    %p455 = pneg %p454
    // Predicated region
    $region9: #{mpnn_layer.1} parent=5 // pred_check
      _
    $region10: #{mpnn_layer.1} parent=5 // pred_check_branch
      %457 = sbr.rel (%p454) target = $region12
    $region11: #{mpnn_layer.1} parent=5 // pred_region
      %s458 = ssub.s32 %s25, 1
      // Predicated region
      $region13: #{mpnn_layer.1} parent=11 // pred_check
        %p459 = pneg %p46
      $region14: #{mpnn_layer.1} parent=11 // pred_check_branch
        %461 = sbr.rel (%p459) target = $region16
      $region15: #{mpnn_layer.1} parent=11 // pred_region
        _
      $region16: #{mpnn_layer.1} parent=11 // pred_fallthru
        _
      // Predicated region
      $region17: #{mpnn_layer.1} parent=11 // pred_check
        %p462 = pneg %p67
      $region18: #{mpnn_layer.1} parent=11 // pred_check_branch
        %464 = sbr.rel (%p462) target = $region20
      $region19: #{mpnn_layer.1} parent=11 // pred_region
        _
      $region20: #{mpnn_layer.1} parent=11 // pred_fallthru
        _
      // Predicated region
      $region21: #{mpnn_layer.1} parent=11 // pred_check
        %p465 = pneg %p88
      $region22: #{mpnn_layer.1} parent=11 // pred_check_branch
        %467 = sbr.rel (%p465) target = $region24
      $region23: #{mpnn_layer.1} parent=11 // pred_region
        _
      $region24: #{mpnn_layer.1} parent=11 // pred_fallthru
        _
      // Predicated region
      $region25: #{mpnn_layer.1} parent=11 // pred_check
        %p468 = pneg %p187
      $region26: #{mpnn_layer.1} parent=11 // pred_check_branch
        %470 = sbr.rel (%p468) target = $region28
      $region27: #{mpnn_layer.1} parent=11 // pred_region
        _
      $region28: #{mpnn_layer.1} parent=11 // pred_fallthru
        _
      // Predicated region
      $region29: #{mpnn_layer.1} parent=11 // pred_check
        %p471 = pneg %p208
      $region30: #{mpnn_layer.1} parent=11 // pred_check_branch
        %473 = sbr.rel (%p471) target = $region32
      $region31: #{mpnn_layer.1} parent=11 // pred_region
        _
      $region32: #{mpnn_layer.1} parent=11 // pred_fallthru
        _
      // Predicated region
      $region33: #{mpnn_layer.1} parent=11 // pred_check
        %p474 = pneg %p229
      $region34: #{mpnn_layer.1} parent=11 // pred_check_branch
        %476 = sbr.rel (%p474) target = $region36
      $region35: #{mpnn_layer.1} parent=11 // pred_region
        _
      $region36: #{mpnn_layer.1} parent=11 // pred_fallthru
        _
      // Predicated region
      $region37: #{mpnn_layer.1} parent=11 // pred_check
        %p477 = pneg %p250
      $region38: #{mpnn_layer.1} parent=11 // pred_check_branch
        %479 = sbr.rel (%p477) target = $region40
      $region39: #{mpnn_layer.1} parent=11 // pred_region
        _
      $region40: #{mpnn_layer.1} parent=11 // pred_fallthru
        _
      // Predicated region
      $region41: #{mpnn_layer.1} parent=11 // pred_check
        %p480 = pneg %p271
      $region42: #{mpnn_layer.1} parent=11 // pred_check_branch
        %482 = sbr.rel (%p480) target = $region44
      $region43: #{mpnn_layer.1} parent=11 // pred_region
        _
      $region44: #{mpnn_layer.1} parent=11 // pred_fallthru
        _
      // Predicated region
      $region45: #{mpnn_layer.1} parent=11 // pred_check
        %p483 = pneg %p292
      $region46: #{mpnn_layer.1} parent=11 // pred_check_branch
        %485 = sbr.rel (%p483) target = $region48
      $region47: #{mpnn_layer.1} parent=11 // pred_region
        _
      $region48: #{mpnn_layer.1} parent=11 // pred_fallthru
        _
      // Predicated region
      $region49: #{mpnn_layer.1} parent=11 // pred_check
        %p486 = pneg %p313
      $region50: #{mpnn_layer.1} parent=11 // pred_check_branch
        %488 = sbr.rel (%p486) target = $region52
      $region51: #{mpnn_layer.1} parent=11 // pred_region
        _
      $region52: #{mpnn_layer.1} parent=11 // pred_fallthru
        _
      // Predicated region
      $region53: #{mpnn_layer.1} parent=11 // pred_check
        %p489 = pneg %p334
      $region54: #{mpnn_layer.1} parent=11 // pred_check_branch
        %491 = sbr.rel (%p489) target = $region56
      $region55: #{mpnn_layer.1} parent=11 // pred_region
        _
      $region56: #{mpnn_layer.1} parent=11 // pred_fallthru
        _
      // Predicated region
      $region57: #{mpnn_layer.1} parent=11 // pred_check
        %p492 = pneg %p355
      $region58: #{mpnn_layer.1} parent=11 // pred_check_branch
        %494 = sbr.rel (%p492) target = $region60
      $region59: #{mpnn_layer.1} parent=11 // pred_region
        _
      $region60: #{mpnn_layer.1} parent=11 // pred_fallthru
        _
      // Predicated region
      $region61: #{mpnn_layer.1} parent=11 // pred_check
        %p495 = pneg %p376
      $region62: #{mpnn_layer.1} parent=11 // pred_check_branch
        %497 = sbr.rel (%p495) target = $region64
      $region63: #{mpnn_layer.1} parent=11 // pred_region
        _
      $region64: #{mpnn_layer.1} parent=11 // pred_fallthru
        _
      // Predicated region
      $region65: #{mpnn_layer.1} parent=11 // pred_check
        %p498 = pneg %p397
      $region66: #{mpnn_layer.1} parent=11 // pred_check_branch
        %500 = sbr.rel (%p498) target = $region68
      $region67: #{mpnn_layer.1} parent=11 // pred_region
        _
      $region68: #{mpnn_layer.1} parent=11 // pred_fallthru
        _
    $region12: #{mpnn_layer.1} parent=5 // pred_fallthru
      _
    %p501 = scmp.lt.s32.totalorder %s25, 2
    // Predicated region
    $region69: #{mpnn_layer.1} parent=5 // pred_check
      %p502 = pneg %p501
    $region70: #{mpnn_layer.1} parent=5 // pred_check_branch
      %504 = sbr.rel (%p502) target = $region72
    $region71: #{mpnn_layer.1} parent=5 // pred_region
      // Predicated region
      $region73: #{mpnn_layer.1} parent=71 // pred_check
        %p505 = pneg %p108
      $region74: #{mpnn_layer.1} parent=71 // pred_check_branch
        %507 = sbr.rel (%p505) target = $region76
      $region75: #{mpnn_layer.1} parent=71 // pred_region
        %s508 = smul.u32 2, %s25
        %p509 = scmp.lt.s32.totalorder %s508, 3
        %s510 = scalar_select %p509, %s508, 3
        %s511 = smul.addr %s510, 8
        %s512 = scalar_lea.vmem %s3, %s511
        %s513 = smul.u32 2, %s25
      $region76: #{mpnn_layer.1} parent=71 // pred_fallthru
        _
      // Predicated region
      $region77: #{mpnn_layer.1} parent=71 // pred_check
        %p514 = pneg %p134
      $region78: #{mpnn_layer.1} parent=71 // pred_check_branch
        %516 = sbr.rel (%p514) target = $region80
      $region79: #{mpnn_layer.1} parent=71 // pred_region
        %s517 = smul.u32 2, %s25
        %p518 = scmp.lt.s32.totalorder %s517, 3
        %s519 = scalar_select %p518, %s517, 3
        %s520 = smul.addr %s519, 4
        %s521 = scalar_lea.vmem %s4, %s520
        %s522 = smul.u32 2, %s25
      $region80: #{mpnn_layer.1} parent=71 // pred_fallthru
        _
      // Predicated region
      $region81: #{mpnn_layer.1} parent=71 // pred_check
        %p523 = pneg %p160
      $region82: #{mpnn_layer.1} parent=71 // pred_check_branch
        %525 = sbr.rel (%p523) target = $region84
      $region83: #{mpnn_layer.1} parent=71 // pred_region
        %s526 = smul.u32 2, %s25
        %p527 = scmp.lt.s32.totalorder %s526, 3
        %s528 = scalar_select %p527, %s526, 3
        %s529 = smul.addr %s528, 4
        %s530 = scalar_lea.vmem %s5, %s529
        %s531 = smul.u32 2, %s25
      $region84: #{mpnn_layer.1} parent=71 // pred_fallthru
        _
    $region72: #{mpnn_layer.1} parent=5 // pred_fallthru
      _
    %p532 = scmp.le.s32.totalorder 1, %s25
    %p533 = scmp.lt.s32.totalorder %s25, 3
    %p534 = pnand %p532, %p533
    %p535 = pneg %p534
    // Predicated region
    $region85: #{mpnn_layer.1} parent=5 // pred_check
      _
    $region86: #{mpnn_layer.1} parent=5 // pred_check_branch
      %537 = sbr.rel (%p534) target = $region88
    $region87: #{mpnn_layer.1} parent=5 // pred_region
      %s538 = ssub.s32 %s25, 1
      %p539 = pneg %p46
      %p540 = pneg %p43
      %p541 = pneg %p67
      %p542 = pneg %p64
      %p543 = pneg %p88
      %p544 = pneg %p85
      %s545 = smul.u32 2, %s30
      %p546 = scmp.lt.s32.totalorder %s545, 3
      %s547 = scalar_select %p546, %s545, 3
      %s548 = smul.addr %s547, 8
      %s549 = scalar_lea.vmem %s3, %s548
      %p550 = pneg %p114
      %p551 = pneg %p111
      %s552 = smul.u32 2, %s30
      %p553 = scmp.lt.s32.totalorder %s552, 3
      %s554 = scalar_select %p553, %s552, 3
      %s555 = smul.addr %s554, 4
      %s556 = scalar_lea.vmem %s4, %s555
      %p557 = pneg %p140
      %p558 = pneg %p137
      %s559 = smul.u32 2, %s30
      %p560 = scmp.lt.s32.totalorder %s559, 3
      %s561 = scalar_select %p560, %s559, 3
      %s562 = smul.addr %s561, 4
      %s563 = scalar_lea.vmem %s5, %s562
      %p564 = pneg %p166
      %p565 = pneg %p163
      %p566 = pneg %p187
      %p567 = pneg %p184
      %p568 = pneg %p208
      %p569 = pneg %p205
      %p570 = pneg %p229
      %p571 = pneg %p226
      %p572 = pneg %p250
      %p573 = pneg %p247
      %p574 = pneg %p271
      %p575 = pneg %p268
      %p576 = pneg %p292
      %p577 = pneg %p289
      %p578 = pneg %p313
      %p579 = pneg %p310
      %p580 = pneg %p334
      %p581 = pneg %p331
      %p582 = pneg %p355
      %p583 = pneg %p352
      %p584 = pneg %p376
      %p585 = pneg %p373
      %p586 = pneg %p397
      %p587 = pneg %p394
      %p588 = pneg %p418
      %p589 = pneg %p415
      %p590 = pneg %p444
      %p591 = pneg %p441
      %s592 = smul.u32 2, %s30
      %p593 = scmp.lt.s32.totalorder %s592, 3
      %s594 = scalar_select %p593, %s592, 3
      %s595 = smul.addr %s594, 8
      %s596 = scalar_lea.vmem %s18, %s595
      %s597 = smul.u32 2, %s30
      %p598 = scmp.lt.s32.totalorder %s597, 3
      %s599 = scalar_select %p598, %s597, 3
      %s600 = smul.addr %s599, 8
      %s601 = scalar_lea.vmem %s3, %s600
      %s602 = smul.u32 2, %s30
      %s603 = smul.u32 2, %s30
      %p604 = scmp.lt.s32.totalorder %s603, 3
      %s605 = scalar_select %p604, %s603, 3
      %s606 = smul.addr %s605, 4
      %s607 = scalar_lea.vmem %s4, %s606
      %s608 = smul.u32 2, %s30
      %s609 = smul.u32 2, %s30
      %p610 = scmp.lt.s32.totalorder %s609, 3
      %s611 = scalar_select %p610, %s609, 3
      %s612 = smul.addr %s611, 4
      %s613 = scalar_lea.vmem %s5, %s612
      %s614 = smul.u32 2, %s30
      %s615 = smul.u32 2, %s30
      %p616 = scmp.lt.s32.totalorder %s615, 3
      %s617 = scalar_select %p616, %s615, 3
      %s618 = smul.addr %s617, 8
      %s619 = scalar_lea.vmem %s18, %s618
      %s620 = smul.u32 2, %s30
      %p622 = scmp.eq.s32.totalorder %s30, 0
      // Predicated region
      $region89: #{mpnn_layer.1} parent=87 // pred_check
        %p623 = pneg %p622
      $region90: #{mpnn_layer.1} parent=87 // pred_check_branch
        %625 = sbr.rel (%p623) target = $region92
      $region91: #{mpnn_layer.1} parent=87 // pred_region
        %vm626 = vcmask 57344
        %627 = vst.msk [vmem:[#allocation2] sm:$0x1] %vm626, -1e+30
        %vm628 = vcmask 64512
        %629 = vst.msk [vmem:[#allocation3] sm:$0xff] %vm628, 0.0
        %630 = vst.msk [vmem:[#allocation3 + $0x8] sm:$0xff] %vm628, 0.0
        %631 = vst.msk [vmem:[#allocation3 + $0x10] sm:$0x1] %vm626, 0.0
      $region92: #{mpnn_layer.1} parent=87 // pred_fallthru
        _
      %v632 = vld [vmem:[%s0] sm:$0xf]
      %v633 = vld [vmem:[%s607] sm:$0xf]
      %v634 = vld [vmem:[%s607 + $0x4] sm:$0xf]
      %v635 = vld [vmem:[%s613] sm:$0xf]
      %v636 = vld [vmem:[%s613 + $0x4] sm:$0xf]
      %v637 = vld [vmem:[%s601] sm:$0xff]
      %v638 = vld [vmem:[%s601 + $0x8] sm:$0xff]
      %v641 = vunpack.c.l.b16 %v633
      %v642 = vunpack.c.l.b16 %v634
      %v643 = vpack.c.b16 %v642, %v641
      %vm644 = vcmask 64512
      %v646 = vsel %vm644, %v643, 0
      %vm648 = vcmask 1043456
      %v650 = vsel %vm648, %v632, 0
      %652 = vmatprep.subr.bf16.mxu0 0
      %653 = vmatpush1.bf16.msra.mxu0 %v650
      %654 = vmatprep.subr.bf16.mxu0 0
      %655 = vmatpush1.bf16.msra.mxu0 0
      %656 = vmatprep.subr.bf16.mxu0 0
      %657 = vmatpush1.bf16.msra.mxu0 0
      %658 = vmatprep.subr.bf16.mxu0 0
      %659 = vmatpush1.bf16.msra.mxu0 0
      %660 = vmatprep.subr.bf16.mxu0 0
      %661 = vmatpush1.bf16.msra.mxu0 0
      %662 = vmatprep.subr.bf16.mxu0 0
      %663 = vmatpush1.bf16.msra.mxu0 0
      %664 = vmatprep.subr.bf16.mxu0 0
      %665 = vmatpush1.bf16.msra.mxu0 0
      %666 = vmatprep.subr.bf16.mxu0 0
      %667 = vmatpush1.bf16.msra.mxu0 0
      %668 = vmatprep.subr.bf16.mxu0 0
      %669 = vmatpush1.bf16.msra.mxu0 0
      %670 = vmatprep.subr.bf16.mxu0 0
      %671 = vmatpush1.bf16.msra.mxu0 0
      %672 = vmatprep.subr.bf16.mxu0 0
      %673 = vmatpush1.bf16.msra.mxu0 0
      %674 = vmatprep.subr.bf16.mxu0 0
      %675 = vmatpush1.bf16.msra.mxu0 0
      %676 = vmatprep.subr.bf16.mxu0 0
      %677 = vmatpush1.bf16.msra.mxu0 0
      %678 = vmatprep.subr.bf16.mxu0 0
      %679 = vmatpush1.bf16.msra.mxu0 0
      %680 = vmatprep.subr.bf16.mxu0 0
      %681 = vmatpush1.bf16.msra.mxu0 0
      %682 = vmatprep.subr.bf16.mxu0 0
      %683 = vmatpush1.bf16.msra.mxu0 0
      %684 = vmatprep.mubr.bf16.mxu0 0
      %685 = vmatmul.mubr.bf16.gmra.mrb[0].mxu0 %v646
      %v686 = vpop.f32.mrb[0].mxu0
      %v687 = vadd.f32 0.0, %v686
      %v688 = vpop.f32.mrb[0].mxu0
      %v689 = vpop.f32.mrb[0].mxu0
      %v690 = vadd.f32 0.0, %v689
      %v691 = vpop.f32.mrb[0].mxu0
      %692 = vdwg.mxu0
      %v695 = vunpack.c.l.b16 %v635
      %v696 = vunpack.c.l.b16 %v636
      %v697 = vpack.c.b16 %v696, %v695
      %v699 = vsel %vm644, %v697, 0
      %701 = vmatprep.subr.bf16.mxu0 0
      %702 = vmatpush1.bf16.msra.mxu0 %v650
      %703 = vmatprep.subr.bf16.mxu0 0
      %704 = vmatpush1.bf16.msra.mxu0 0
      %705 = vmatprep.subr.bf16.mxu0 0
      %706 = vmatpush1.bf16.msra.mxu0 0
      %707 = vmatprep.subr.bf16.mxu0 0
      %708 = vmatpush1.bf16.msra.mxu0 0
      %709 = vmatprep.subr.bf16.mxu0 0
      %710 = vmatpush1.bf16.msra.mxu0 0
      %711 = vmatprep.subr.bf16.mxu0 0
      %712 = vmatpush1.bf16.msra.mxu0 0
      %713 = vmatprep.subr.bf16.mxu0 0
      %714 = vmatpush1.bf16.msra.mxu0 0
      %715 = vmatprep.subr.bf16.mxu0 0
      %716 = vmatpush1.bf16.msra.mxu0 0
      %717 = vmatprep.subr.bf16.mxu0 0
      %718 = vmatpush1.bf16.msra.mxu0 0
      %719 = vmatprep.subr.bf16.mxu0 0
      %720 = vmatpush1.bf16.msra.mxu0 0
      %721 = vmatprep.subr.bf16.mxu0 0
      %722 = vmatpush1.bf16.msra.mxu0 0
      %723 = vmatprep.subr.bf16.mxu0 0
      %724 = vmatpush1.bf16.msra.mxu0 0
      %725 = vmatprep.subr.bf16.mxu0 0
      %726 = vmatpush1.bf16.msra.mxu0 0
      %727 = vmatprep.subr.bf16.mxu0 0
      %728 = vmatpush1.bf16.msra.mxu0 0
      %729 = vmatprep.subr.bf16.mxu0 0
      %730 = vmatpush1.bf16.msra.mxu0 0
      %731 = vmatprep.subr.bf16.mxu0 0
      %732 = vmatpush1.bf16.msra.mxu0 0
      %733 = vmatprep.mubr.bf16.mxu0 0
      %734 = vmatmul.mubr.bf16.gmra.mrb[0].mxu0 %v699
      %v735 = vpop.f32.mrb[0].mxu0
      %v736 = vadd.f32 0.0, %v735
      %v737 = vpop.f32.mrb[0].mxu0
      %v738 = vpop.f32.mrb[0].mxu0
      %v739 = vadd.f32 0.0, %v738
      %v740 = vpop.f32.mrb[0].mxu0
      %741 = vdwg.mxu0
      %v742 = vld [vmem:[%s6] sm:$0xf]
      %v743 = vld [vmem:[%s7] sm:$0xff]
      %v745 = vsel %vm644, %v687, 0
      %v748 = vsel %vm644, %v690, 0
      %750 = vmatprep.subr.mxu0 0.0
      %751 = vmatpush1.msra.mxu0 %v743
      %752 = vmatprep.subr.mxu0 0.0
      %753 = vmatpush1.msra.mxu0 0.0
      %754 = vmatprep.subr.mxu0 0.0
      %755 = vmatpush1.msra.mxu0 0.0
      %756 = vmatprep.subr.mxu0 0.0
      %757 = vmatpush1.msra.mxu0 0.0
      %758 = vmatprep.subr.mxu0 0.0
      %759 = vmatpush1.msra.mxu0 0.0
      %760 = vmatprep.subr.mxu0 0.0
      %761 = vmatpush1.msra.mxu0 0.0
      %762 = vmatprep.subr.mxu0 0.0
      %763 = vmatpush1.msra.mxu0 0.0
      %764 = vmatprep.subr.mxu0 0.0
      %765 = vmatpush1.msra.mxu0 0.0
      %766 = vmatprep.subr.mxu0 0.0
      %767 = vmatpush1.msra.mxu0 0.0
      %768 = vmatprep.subr.mxu0 0.0
      %769 = vmatpush1.msra.mxu0 0.0
      %770 = vmatprep.subr.mxu0 0.0
      %771 = vmatpush1.msra.mxu0 0.0
      %772 = vmatprep.subr.mxu0 0.0
      %773 = vmatpush1.msra.mxu0 0.0
      %774 = vmatprep.subr.mxu0 0.0
      %775 = vmatpush1.msra.mxu0 0.0
      %776 = vmatprep.subr.mxu0 0.0
      %777 = vmatpush1.msra.mxu0 0.0
      %778 = vmatprep.subr.mxu0 0.0
      %779 = vmatpush1.msra.mxu0 0.0
      %780 = vmatprep.subr.mxu0 0.0
      %781 = vmatpush1.msra.mxu0 0.0
      %782 = vmatprep.subr.mxu0 0.0
      %783 = vmatpush1.msra.mxu0 0.0
      %784 = vmatprep.subr.mxu0 0.0
      %785 = vmatpush1.msra.mxu0 0.0
      %786 = vmatprep.subr.mxu0 0.0
      %787 = vmatpush1.msra.mxu0 0.0
      %788 = vmatprep.subr.mxu0 0.0
      %789 = vmatpush1.msra.mxu0 0.0
      %790 = vmatprep.subr.mxu0 0.0
      %791 = vmatpush1.msra.mxu0 0.0
      %792 = vmatprep.subr.mxu0 0.0
      %793 = vmatpush1.msra.mxu0 0.0
      %794 = vmatprep.subr.mxu0 0.0
      %795 = vmatpush1.msra.mxu0 0.0
      %796 = vmatprep.subr.mxu0 0.0
      %797 = vmatpush1.msra.mxu0 0.0
      %798 = vmatprep.subr.mxu0 0.0
      %799 = vmatpush1.msra.mxu0 0.0
      %800 = vmatprep.subr.mxu0 0.0
      %801 = vmatpush1.msra.mxu0 0.0
      %802 = vmatprep.subr.mxu0 0.0
      %803 = vmatpush1.msra.mxu0 0.0
      %804 = vmatprep.subr.mxu0 0.0
      %805 = vmatpush1.msra.mxu0 0.0
      %806 = vmatprep.subr.mxu0 0.0
      %807 = vmatpush1.msra.mxu0 0.0
      %808 = vmatprep.subr.mxu0 0.0
      %809 = vmatpush1.msra.mxu0 0.0
      %810 = vmatprep.subr.mxu0 0.0
      %811 = vmatpush1.msra.mxu0 0.0
      %812 = vmatprep.subr.mxu0 0.0
      %813 = vmatpush1.msra.mxu0 0.0
      %814 = vmatprep.mubr.f32.mxu0 0.0
      %815 = vmatmul.mubr.f32.gmra.mrb[0].mxu0 %v745
      %v816 = vpop.f32.mrb[0].mxu0
      %v817 = vadd.f32 0.0, %v816
      %v818 = vpop.f32.mrb[0].mxu0
      %819 = vmatprep.mubr.f32.mxu0 0.0
      %820 = vmatmul.mubr.f32.gmra.mrb[0].mxu0 %v748
      %v821 = vpop.f32.mrb[0].mxu0
      %v822 = vadd.f32 0.0, %v821
      %v823 = vpop.f32.mrb[0].mxu0
      %824 = vdwg.mxu0
      %vm825 = vcmask 31744
      %v827 = vsel %vm825, %v637, 0
      %v830 = vsel %vm825, %v638, 0
      %v833 = vsel %vm648, %v742, 0
      %835 = vmatprep.subr.mxu0 0.0
      %836 = vmatpush1.msra.mxu0 %v833
      %837 = vmatprep.subr.mxu0 0.0
      %838 = vmatpush1.msra.mxu0 0.0
      %839 = vmatprep.subr.mxu0 0.0
      %840 = vmatpush1.msra.mxu0 0.0
      %841 = vmatprep.subr.mxu0 0.0
      %842 = vmatpush1.msra.mxu0 0.0
      %843 = vmatprep.subr.mxu0 0.0
      %844 = vmatpush1.msra.mxu0 0.0
      %845 = vmatprep.subr.mxu0 0.0
      %846 = vmatpush1.msra.mxu0 0.0
      %847 = vmatprep.subr.mxu0 0.0
      %848 = vmatpush1.msra.mxu0 0.0
      %849 = vmatprep.subr.mxu0 0.0
      %850 = vmatpush1.msra.mxu0 0.0
      %851 = vmatprep.subr.mxu0 0.0
      %852 = vmatpush1.msra.mxu0 0.0
      %853 = vmatprep.subr.mxu0 0.0
      %854 = vmatpush1.msra.mxu0 0.0
      %855 = vmatprep.subr.mxu0 0.0
      %856 = vmatpush1.msra.mxu0 0.0
      %857 = vmatprep.subr.mxu0 0.0
      %858 = vmatpush1.msra.mxu0 0.0
      %859 = vmatprep.subr.mxu0 0.0
      %860 = vmatpush1.msra.mxu0 0.0
      %861 = vmatprep.subr.mxu0 0.0
      %862 = vmatpush1.msra.mxu0 0.0
      %863 = vmatprep.subr.mxu0 0.0
      %864 = vmatpush1.msra.mxu0 0.0
      %865 = vmatprep.subr.mxu0 0.0
      %866 = vmatpush1.msra.mxu0 0.0
      %867 = vmatprep.subr.mxu0 0.0
      %868 = vmatpush1.msra.mxu0 0.0
      %869 = vmatprep.subr.mxu0 0.0
      %870 = vmatpush1.msra.mxu0 0.0
      %871 = vmatprep.subr.mxu0 0.0
      %872 = vmatpush1.msra.mxu0 0.0
      %873 = vmatprep.subr.mxu0 0.0
      %874 = vmatpush1.msra.mxu0 0.0
      %875 = vmatprep.subr.mxu0 0.0
      %876 = vmatpush1.msra.mxu0 0.0
      %877 = vmatprep.subr.mxu0 0.0
      %878 = vmatpush1.msra.mxu0 0.0
      %879 = vmatprep.subr.mxu0 0.0
      %880 = vmatpush1.msra.mxu0 0.0
      %881 = vmatprep.subr.mxu0 0.0
      %882 = vmatpush1.msra.mxu0 0.0
      %883 = vmatprep.subr.mxu0 0.0
      %884 = vmatpush1.msra.mxu0 0.0
      %885 = vmatprep.subr.mxu0 0.0
      %886 = vmatpush1.msra.mxu0 0.0
      %887 = vmatprep.subr.mxu0 0.0
      %888 = vmatpush1.msra.mxu0 0.0
      %889 = vmatprep.subr.mxu0 0.0
      %890 = vmatpush1.msra.mxu0 0.0
      %891 = vmatprep.subr.mxu0 0.0
      %892 = vmatpush1.msra.mxu0 0.0
      %893 = vmatprep.subr.mxu0 0.0
      %894 = vmatpush1.msra.mxu0 0.0
      %895 = vmatprep.subr.mxu0 0.0
      %896 = vmatpush1.msra.mxu0 0.0
      %897 = vmatprep.subr.mxu0 0.0
      %898 = vmatpush1.msra.mxu0 0.0
      %899 = vmatprep.mubr.f32.mxu0 0.0
      %900 = vmatmul.mubr.f32.gmra.mrb[0].mxu0 %v827
      %v901 = vpop.f32.mrb[0].mxu0
      %v902 = vadd.f32 %v817, %v901
      %v903 = vpop.f32.mrb[0].mxu0
      %904 = vmatprep.mubr.f32.mxu0 0.0
      %905 = vmatmul.mubr.f32.gmra.mrb[0].mxu0 %v830
      %v906 = vpop.f32.mrb[0].mxu0
      %v907 = vadd.f32 %v822, %v906
      %v908 = vpop.f32.mrb[0].mxu0
      %909 = vdwg.mxu0
      %v910 = vld [vmem:[%s8] sm:$0xff]
      %v912 = vsel %vm644, %v736, 0
      %v915 = vsel %vm644, %v739, 0
      %917 = vmatprep.subr.mxu0 0.0
      %918 = vmatpush1.msra.mxu0 %v910
      %919 = vmatprep.subr.mxu0 0.0
      %920 = vmatpush1.msra.mxu0 0.0
      %921 = vmatprep.subr.mxu0 0.0
      %922 = vmatpush1.msra.mxu0 0.0
      %923 = vmatprep.subr.mxu0 0.0
      %924 = vmatpush1.msra.mxu0 0.0
      %925 = vmatprep.subr.mxu0 0.0
      %926 = vmatpush1.msra.mxu0 0.0
      %927 = vmatprep.subr.mxu0 0.0
      %928 = vmatpush1.msra.mxu0 0.0
      %929 = vmatprep.subr.mxu0 0.0
      %930 = vmatpush1.msra.mxu0 0.0
      %931 = vmatprep.subr.mxu0 0.0
      %932 = vmatpush1.msra.mxu0 0.0
      %933 = vmatprep.subr.mxu0 0.0
      %934 = vmatpush1.msra.mxu0 0.0
      %935 = vmatprep.subr.mxu0 0.0
      %936 = vmatpush1.msra.mxu0 0.0
      %937 = vmatprep.subr.mxu0 0.0
      %938 = vmatpush1.msra.mxu0 0.0
      %939 = vmatprep.subr.mxu0 0.0
      %940 = vmatpush1.msra.mxu0 0.0
      %941 = vmatprep.subr.mxu0 0.0
      %942 = vmatpush1.msra.mxu0 0.0
      %943 = vmatprep.subr.mxu0 0.0
      %944 = vmatpush1.msra.mxu0 0.0
      %945 = vmatprep.subr.mxu0 0.0
      %946 = vmatpush1.msra.mxu0 0.0
      %947 = vmatprep.subr.mxu0 0.0
      %948 = vmatpush1.msra.mxu0 0.0
      %949 = vmatprep.subr.mxu0 0.0
      %950 = vmatpush1.msra.mxu0 0.0
      %951 = vmatprep.subr.mxu0 0.0
      %952 = vmatpush1.msra.mxu0 0.0
      %953 = vmatprep.subr.mxu0 0.0
      %954 = vmatpush1.msra.mxu0 0.0
      %955 = vmatprep.subr.mxu0 0.0
      %956 = vmatpush1.msra.mxu0 0.0
      %957 = vmatprep.subr.mxu0 0.0
      %958 = vmatpush1.msra.mxu0 0.0
      %959 = vmatprep.subr.mxu0 0.0
      %960 = vmatpush1.msra.mxu0 0.0
      %961 = vmatprep.subr.mxu0 0.0
      %962 = vmatpush1.msra.mxu0 0.0
      %963 = vmatprep.subr.mxu0 0.0
      %964 = vmatpush1.msra.mxu0 0.0
      %965 = vmatprep.subr.mxu0 0.0
      %966 = vmatpush1.msra.mxu0 0.0
      %967 = vmatprep.subr.mxu0 0.0
      %968 = vmatpush1.msra.mxu0 0.0
      %969 = vmatprep.subr.mxu0 0.0
      %970 = vmatpush1.msra.mxu0 0.0
      %971 = vmatprep.subr.mxu0 0.0
      %972 = vmatpush1.msra.mxu0 0.0
      %973 = vmatprep.subr.mxu0 0.0
      %974 = vmatpush1.msra.mxu0 0.0
      %975 = vmatprep.subr.mxu0 0.0
      %976 = vmatpush1.msra.mxu0 0.0
      %977 = vmatprep.subr.mxu0 0.0
      %978 = vmatpush1.msra.mxu0 0.0
      %979 = vmatprep.subr.mxu0 0.0
      %980 = vmatpush1.msra.mxu0 0.0
      %981 = vmatprep.mubr.f32.mxu0 0.0
      %982 = vmatmul.mubr.f32.gmra.mrb[0].mxu0 %v912
      %v983 = vpop.f32.mrb[0].mxu0
      %v984 = vadd.f32 0.0, %v983
      %v985 = vpop.f32.mrb[0].mxu0
      %986 = vmatprep.mubr.f32.mxu0 0.0
      %987 = vmatmul.mubr.f32.gmra.mrb[0].mxu0 %v915
      %v988 = vpop.f32.mrb[0].mxu0
      %v989 = vadd.f32 0.0, %v988
      %v990 = vpop.f32.mrb[0].mxu0
      %991 = vdwg.mxu0
      %v992 = vadd.f32 %v902, %v984
      %v993 = vadd.f32 %v907, %v989
      %v994 = vld [vmem:[%s9] sm:$0x1]
      %v996 = vlaneseq
      %v997 = vshrl.u32 %v996, 7
      %v998 = vsub.s32 0, %v997
      %v999 = vrot.slane %v994, %v998
      %v1001 = vadd.f32 %v992, %v999
      %v1002 = vadd.f32 %v993, %v999
      %v1003 = vmax.f32 %v1001, 0.0
      %v1004 = vmax.f32 %v1002, 0.0
      %v1005 = vld [vmem:[%s10] sm:$0xff]
      %v1006 = vld [vmem:[%s10 + $0x8] sm:$0xff]
      %v1007 = vld [vmem:[%s10 + $0x10] sm:$0xff]
      %v1008 = vld [vmem:[%s10 + $0x18] sm:$0xff]
      %v1009 = vld [vmem:[%s10 + $0x20] sm:$0xff]
      %v1010 = vld [vmem:[%s10 + $0x28] sm:$0xff]
      %v1011 = vld [vmem:[%s10 + $0x30] sm:$0xff]
      %v1012 = vld [vmem:[%s10 + $0x38] sm:$0xff]
      %v1013 = vld [vmem:[%s11] sm:$0x1]
      %v1015 = vlaneseq
      %v1016 = vshrl.u32 %v1015, 7
      %v1017 = vsub.s32 0, %v1016
      %v1018 = vrot.slane %v1013, %v1017
      %vm1020 = vcmask 523264
      %v1022 = vsel %vm1020, %v1003, 0
      %v1025 = vsel %vm1020, %v1004, 0
      %1027 = vmatprep.subr.mxu0 0.0
      %1028 = vmatpush1.msra.mxu0 %v1005
      %1029 = vmatprep.subr.mxu0 0.0
      %1030 = vmatpush1.msra.mxu0 %v1006
      %1031 = vmatprep.subr.mxu0 0.0
      %1032 = vmatpush1.msra.mxu0 %v1007
      %1033 = vmatprep.subr.mxu0 0.0
      %1034 = vmatpush1.msra.mxu0 %v1008
      %1035 = vmatprep.subr.mxu0 0.0
      %1036 = vmatpush1.msra.mxu0 %v1009
      %1037 = vmatprep.subr.mxu0 0.0
      %1038 = vmatpush1.msra.mxu0 %v1010
      %1039 = vmatprep.subr.mxu0 0.0
      %1040 = vmatpush1.msra.mxu0 %v1011
      %1041 = vmatprep.subr.mxu0 0.0
      %1042 = vmatpush1.msra.mxu0 %v1012
      %1043 = vmatprep.subr.mxu0 0.0
      %1044 = vmatpush1.msra.mxu0 0.0
      %1045 = vmatprep.subr.mxu0 0.0
      %1046 = vmatpush1.msra.mxu0 0.0
      %1047 = vmatprep.subr.mxu0 0.0
      %1048 = vmatpush1.msra.mxu0 0.0
      %1049 = vmatprep.subr.mxu0 0.0
      %1050 = vmatpush1.msra.mxu0 0.0
      %1051 = vmatprep.subr.mxu0 0.0
      %1052 = vmatpush1.msra.mxu0 0.0
      %1053 = vmatprep.subr.mxu0 0.0
      %1054 = vmatpush1.msra.mxu0 0.0
      %1055 = vmatprep.subr.mxu0 0.0
      %1056 = vmatpush1.msra.mxu0 0.0
      %1057 = vmatprep.subr.mxu0 0.0
      %1058 = vmatpush1.msra.mxu0 0.0
      %1059 = vmatprep.subr.mxu0 0.0
      %1060 = vmatpush1.msra.mxu0 0.0
      %1061 = vmatprep.subr.mxu0 0.0
      %1062 = vmatpush1.msra.mxu0 0.0
      %1063 = vmatprep.subr.mxu0 0.0
      %1064 = vmatpush1.msra.mxu0 0.0
      %1065 = vmatprep.subr.mxu0 0.0
      %1066 = vmatpush1.msra.mxu0 0.0
      %1067 = vmatprep.subr.mxu0 0.0
      %1068 = vmatpush1.msra.mxu0 0.0
      %1069 = vmatprep.subr.mxu0 0.0
      %1070 = vmatpush1.msra.mxu0 0.0
      %1071 = vmatprep.subr.mxu0 0.0
      %1072 = vmatpush1.msra.mxu0 0.0
      %1073 = vmatprep.subr.mxu0 0.0
      %1074 = vmatpush1.msra.mxu0 0.0
      %1075 = vmatprep.subr.mxu0 0.0
      %1076 = vmatpush1.msra.mxu0 0.0
      %1077 = vmatprep.subr.mxu0 0.0
      %1078 = vmatpush1.msra.mxu0 0.0
      %1079 = vmatprep.subr.mxu0 0.0
      %1080 = vmatpush1.msra.mxu0 0.0
      %1081 = vmatprep.subr.mxu0 0.0
      %1082 = vmatpush1.msra.mxu0 0.0
      %1083 = vmatprep.subr.mxu0 0.0
      %1084 = vmatpush1.msra.mxu0 0.0
      %1085 = vmatprep.subr.mxu0 0.0
      %1086 = vmatpush1.msra.mxu0 0.0
      %1087 = vmatprep.subr.mxu0 0.0
      %1088 = vmatpush1.msra.mxu0 0.0
      %1089 = vmatprep.subr.mxu0 0.0
      %1090 = vmatpush1.msra.mxu0 0.0
      %1091 = vmatprep.mubr.f32.mxu0 0.0
      %1092 = vmatmul.mubr.f32.gmra.mrb[0].mxu0 %v1022
      %v1093 = vpop.f32.mrb[0].mxu0
      %v1094 = vadd.f32 %v1018, %v1093
      %v1095 = vpop.f32.mrb[0].mxu0
      %1096 = vmatprep.mubr.f32.mxu0 0.0
      %1097 = vmatmul.mubr.f32.gmra.mrb[0].mxu0 %v1025
      %v1098 = vpop.f32.mrb[0].mxu0
      %v1099 = vadd.f32 %v1018, %v1098
      %v1100 = vpop.f32.mrb[0].mxu0
      %1101 = vdwg.mxu0
      %vm1102 = vcmask 130048
      %1103 = vst.msk [vmem:[%s619] sm:$0xff] %vm1102, %v1094
      %1104 = vst.msk [vmem:[%s619 + $0x8] sm:$0xff] %vm1102, %v1099
      %v1105 = vunpack.c.l.bf16 %v635
      %v1106 = vunpack.c.l.bf16 %v636
      %1108 = vset.pattern.permute.xlu0 16
      %1109 = vperm.xlu0 %1108, %v1094
      %v1110 = vpop.permute.xlu0 %1109
      %1113 = vset.pattern.permute.xlu0 16
      %1114 = vperm.xlu0 %1113, %v1099
      %v1115 = vpop.permute.xlu0 %1114
      %v1117 = vmul.f32 %v1105, %v1110
      %v1118 = vmul.f32 %v1106, %v1115
      %v1119 = vsub.f32 %v1105, 1.0
      %v1120 = vsub.f32 %v1106, 1.0
      %v1121 = vmul.f32 %v1119, 1e+30
      %v1122 = vmul.f32 %v1120, 1e+30
      %v1123 = vadd.f32 %v1117, %v1121
      %v1124 = vadd.f32 %v1118, %v1122
      %v1125 = vsel %vm644, %v1123, -inf
      %v1126 = vsel %vm644, %v1124, -inf
      %v1127 = vmax.f32 %v1125, %v1126
      %v1128 = vrot.slane %v1127, 4
      %v1129 = vmax.f32 %v1127, %v1128
      %v1130 = vrot.slane %v1129, 2
      %v1131 = vmax.f32 %v1129, %v1130
      %v1132 = vrot.slane %v1131, 1
      %v1133 = vmax.f32 %v1131, %v1132
      %v1134 = vld [vmem:[#allocation2] sm:$0x1]
      %v1135 = vmax.f32 %v1134, %v1133
      %v1136 = vsub.f32 %v1134, %v1135
      %v1137 = vmul.f32 %v1136, 1.442695
      %v1138 = vpow.pop %v1137
      %v1140 = vlaneseq
      %v1141 = vshrl.u32 %v1140, 7
      %v1142 = vsub.s32 0, %v1141
      %v1143 = vrot.slane %v1135, %v1142
      %v1145 = vmul.f32 %v1105, %v1143
      %v1146 = vmul.f32 %v1106, %v1143
      %v1147 = vsel %vm644, %v1145, 0.0
      %1148 = vadd.xlane.f32.xlu0 %v1147
      %v1149 = vpop.xlane.xlu0 %1148
      %v1150 = vsel %vm644, %v1146, 0.0
      %1151 = vadd.xlane.f32.xlu0 %v1150
      %v1152 = vpop.xlane.xlu0 %1151
      %v1153 = vsub.f32 %v1094, %v1149
      %v1154 = vsub.f32 %v1099, %v1152
      %v1155 = vmul.f32 %v1153, 1.442695
      %v1156 = vpow.pop %v1155
      %v1157 = vmul.f32 %v1154, 1.442695
      %v1158 = vpow.pop %v1157
      %v1159 = vlaneseq
      %v1160 = vand.u32 %v1159, 127
      %vm1161 = vcmp.eq.s32.totalorder %v1160, 16
      %v1162 = vsel %vm1161, 1.0, %v1094
      %v1163 = vsel %vm1161, 1.0, %v1099
      %1165 = vset.pattern.permute.xlu0 16
      %1166 = vperm.xlu0 %1165, %v1156
      %v1167 = vpop.permute.xlu0 %1166
      %1170 = vset.pattern.permute.xlu0 16
      %1171 = vperm.xlu0 %1170, %v1158
      %v1172 = vpop.permute.xlu0 %1171
      %v1174 = vmul.f32 %v1162, %v1167
      %v1175 = vmul.f32 %v1163, %v1172
      %v1176 = vpack.c.bf16 %v1175, %v1174
      %1177 = vxpose.xlu0.c.b16.start [1/8] %v1176, 128
      %1178 = vxpose.xlu0.c.b16.cont [2/8] 0, 128
      %1179 = vxpose.xlu0.c.b16.cont [3/8] 0, 128
      %1180 = vxpose.xlu0.c.b16.cont [4/8] 0, 128
      %1181 = vxpose.xlu0.c.b16.cont [5/8] 0, 128
      %1182 = vxpose.xlu0.c.b16.cont [6/8] 0, 128
      %1183 = vxpose.xlu0.c.b16.cont [7/8] 0, 128
      %1184 = vxpose.xlu0.c.b16.end [8/8] 0, 128
      %v1185 = vpop.trf.xlu0
      %v1186 = vpop.trf.xlu0
      %v1187 = vpop.trf.xlu0
      %v1188 = vpop.trf.xlu0
      %v1189 = vpop.trf.xlu0
      %v1190 = vpop.trf.xlu0
      %v1191 = vpop.trf.xlu0
      %v1192 = vpop.trf.xlu0
      %v1195 = vsel %vm1102, %v1185, 0
      %v1198 = vsel %vm1102, %v1186, 0
      %1200 = vmatprep.subr.bf16.mxu0 0
      %1201 = vmatpush1.bf16.msra.mxu0 %v697
      %1202 = vmatprep.subr.bf16.mxu0 0
      %1203 = vmatpush1.bf16.msra.mxu0 0
      %1204 = vmatprep.subr.bf16.mxu0 0
      %1205 = vmatpush1.bf16.msra.mxu0 0
      %1206 = vmatprep.subr.bf16.mxu0 0
      %1207 = vmatpush1.bf16.msra.mxu0 0
      %1208 = vmatprep.subr.bf16.mxu0 0
      %1209 = vmatpush1.bf16.msra.mxu0 0
      %1210 = vmatprep.subr.bf16.mxu0 0
      %1211 = vmatpush1.bf16.msra.mxu0 0
      %1212 = vmatprep.subr.bf16.mxu0 0
      %1213 = vmatpush1.bf16.msra.mxu0 0
      %1214 = vmatprep.subr.bf16.mxu0 0
      %1215 = vmatpush1.bf16.msra.mxu0 0
      %1216 = vmatprep.subr.bf16.mxu0 0
      %1217 = vmatpush1.bf16.msra.mxu0 0
      %1218 = vmatprep.subr.bf16.mxu0 0
      %1219 = vmatpush1.bf16.msra.mxu0 0
      %1220 = vmatprep.subr.bf16.mxu0 0
      %1221 = vmatpush1.bf16.msra.mxu0 0
      %1222 = vmatprep.subr.bf16.mxu0 0
      %1223 = vmatpush1.bf16.msra.mxu0 0
      %1224 = vmatprep.subr.bf16.mxu0 0
      %1225 = vmatpush1.bf16.msra.mxu0 0
      %1226 = vmatprep.subr.bf16.mxu0 0
      %1227 = vmatpush1.bf16.msra.mxu0 0
      %1228 = vmatprep.subr.bf16.mxu0 0
      %1229 = vmatpush1.bf16.msra.mxu0 0
      %1230 = vmatprep.subr.bf16.mxu0 0
      %1231 = vmatpush1.bf16.msra.mxu0 0
      %1232 = vmatprep.mubr.bf16.mxu0 0
      %1233 = vmatmul.mubr.bf16.gmra.mrb[0].mxu0 %v1195
      %v1234 = vpop.f32.mrb[0].mxu0
      %v1235 = vadd.f32 0.0, %v1234
      %v1236 = vpop.f32.mrb[0].mxu0
      %v1237 = vpop.f32.mrb[0].mxu0
      %v1238 = vadd.f32 0.0, %v1237
      %v1239 = vpop.f32.mrb[0].mxu0
      %1240 = vmatprep.mubr.bf16.mxu0 0
      %1241 = vmatmul.mubr.bf16.gmra.mrb[0].mxu0 %v1198
      %v1242 = vpop.f32.mrb[0].mxu0
      %v1243 = vadd.f32 0.0, %v1242
      %v1244 = vpop.f32.mrb[0].mxu0
      %v1245 = vpop.f32.mrb[0].mxu0
      %v1246 = vpop.f32.mrb[0].mxu0
      %1247 = vdwg.mxu0
      %v1248 = vld [vmem:[#allocation3] sm:$0xff]
      %v1249 = vld [vmem:[#allocation3 + $0x8] sm:$0xff]
      %v1250 = vld [vmem:[#allocation3 + $0x10] sm:$0x1]
      %v1252 = vlaneseq
      %v1253 = vshrl.u32 %v1252, 7
      %v1254 = vsub.s32 0, %v1253
      %v1255 = vrot.slane %v1138, %v1254
      %v1257 = vmul.f32 %v1248, %v1255
      %v1258 = vmul.f32 %v1249, %v1255
      %v1259 = vmul.f32 %v1250, %v1255
      %v1260 = vadd.f32 %v1257, %v1235
      %v1261 = vadd.f32 %v1258, %v1238
      %v1262 = vadd.f32 %v1259, %v1243
      %1263 = vst.msk [vmem:[#allocation3] sm:$0xff] %vm644, %v1260
      %1264 = vst.msk [vmem:[#allocation3 + $0x8] sm:$0xff] %vm644, %v1261
      %vm1265 = vcmask 57344
      %1266 = vst.msk [vmem:[#allocation3 + $0x10] sm:$0x1] %vm1265, %v1262
      %1267 = vst.msk [vmem:[#allocation2] sm:$0x1] %vm1265, %v1135
      %p1268 = scmp.eq.s32.totalorder %s30, 1
      // Predicated region
      $region93: #{mpnn_layer.1} parent=87 // pred_check
        %p1269 = pneg %p1268
      $region94: #{mpnn_layer.1} parent=87 // pred_check_branch
        %1271 = sbr.rel (%p1269) target = $region96
      $region95: #{mpnn_layer.1} parent=87 // pred_region
        %v1272 = vld [vmem:[#allocation3] sm:$0xff]
        %v1273 = vld [vmem:[#allocation3 + $0x8] sm:$0xff]
        %v1274 = vld [vmem:[#allocation3 + $0x10] sm:$0x1]
        %v1275 = vld [vmem:[%s2] sm:$0x1]
        %v1276 = vmax.f32 %v1275, 1.0
        %v1277 = vmul.f32 %v1274, %v1276
        %v1278 = vmax.f32 %v1277, 1e-30
        %v1279 = vrcp.pop %v1278
        %v1280 = vlaneseq
        %v1281 = vshrl.u32 %v1280, 7
        %v1282 = vsub.s32 0, %v1281
        %v1283 = vrot.slane %v1279, %v1282
        %v1284 = vmul.f32 %v1272, %v1283
        %v1285 = vmul.f32 %v1273, %v1283
        %v1286 = vld [vmem:[%s12] sm:$0xff]
        %v1287 = vld [vmem:[%s12 + $0x8] sm:$0xff]
        %v1288 = vld [vmem:[%s12 + $0x10] sm:$0xff]
        %v1289 = vld [vmem:[%s12 + $0x18] sm:$0xff]
        %v1290 = vld [vmem:[%s13] sm:$0xff]
        %v1291 = vld [vmem:[%s13 + $0x8] sm:$0xff]
        %v1292 = vld [vmem:[%s13 + $0x10] sm:$0xff]
        %v1293 = vld [vmem:[%s13 + $0x18] sm:$0xff]
        %v1294 = vld [vmem:[%s1] sm:$0xff]
        %v1296 = vsel %vm644, %v1290, 0
        %v1299 = vsel %vm644, %v1291, 0
        %v1302 = vsel %vm644, %v1292, 0
        %v1305 = vsel %vm644, %v1293, 0
        %1307 = vmatprep.subr.mxu0 0.0
        %1308 = vmatpush1.msra.mxu0 %v1294
        %1309 = vmatprep.subr.mxu0 0.0
        %1310 = vmatpush1.msra.mxu0 0.0
        %1311 = vmatprep.subr.mxu0 0.0
        %1312 = vmatpush1.msra.mxu0 0.0
        %1313 = vmatprep.subr.mxu0 0.0
        %1314 = vmatpush1.msra.mxu0 0.0
        %1315 = vmatprep.subr.mxu0 0.0
        %1316 = vmatpush1.msra.mxu0 0.0
        %1317 = vmatprep.subr.mxu0 0.0
        %1318 = vmatpush1.msra.mxu0 0.0
        %1319 = vmatprep.subr.mxu0 0.0
        %1320 = vmatpush1.msra.mxu0 0.0
        %1321 = vmatprep.subr.mxu0 0.0
        %1322 = vmatpush1.msra.mxu0 0.0
        %1323 = vmatprep.subr.mxu0 0.0
        %1324 = vmatpush1.msra.mxu0 0.0
        %1325 = vmatprep.subr.mxu0 0.0
        %1326 = vmatpush1.msra.mxu0 0.0
        %1327 = vmatprep.subr.mxu0 0.0
        %1328 = vmatpush1.msra.mxu0 0.0
        %1329 = vmatprep.subr.mxu0 0.0
        %1330 = vmatpush1.msra.mxu0 0.0
        %1331 = vmatprep.subr.mxu0 0.0
        %1332 = vmatpush1.msra.mxu0 0.0
        %1333 = vmatprep.subr.mxu0 0.0
        %1334 = vmatpush1.msra.mxu0 0.0
        %1335 = vmatprep.subr.mxu0 0.0
        %1336 = vmatpush1.msra.mxu0 0.0
        %1337 = vmatprep.subr.mxu0 0.0
        %1338 = vmatpush1.msra.mxu0 0.0
        %1339 = vmatprep.subr.mxu0 0.0
        %1340 = vmatpush1.msra.mxu0 0.0
        %1341 = vmatprep.subr.mxu0 0.0
        %1342 = vmatpush1.msra.mxu0 0.0
        %1343 = vmatprep.subr.mxu0 0.0
        %1344 = vmatpush1.msra.mxu0 0.0
        %1345 = vmatprep.subr.mxu0 0.0
        %1346 = vmatpush1.msra.mxu0 0.0
        %1347 = vmatprep.subr.mxu0 0.0
        %1348 = vmatpush1.msra.mxu0 0.0
        %1349 = vmatprep.subr.mxu0 0.0
        %1350 = vmatpush1.msra.mxu0 0.0
        %1351 = vmatprep.subr.mxu0 0.0
        %1352 = vmatpush1.msra.mxu0 0.0
        %1353 = vmatprep.subr.mxu0 0.0
        %1354 = vmatpush1.msra.mxu0 0.0
        %1355 = vmatprep.subr.mxu0 0.0
        %1356 = vmatpush1.msra.mxu0 0.0
        %1357 = vmatprep.subr.mxu0 0.0
        %1358 = vmatpush1.msra.mxu0 0.0
        %1359 = vmatprep.subr.mxu0 0.0
        %1360 = vmatpush1.msra.mxu0 0.0
        %1361 = vmatprep.subr.mxu0 0.0
        %1362 = vmatpush1.msra.mxu0 0.0
        %1363 = vmatprep.subr.mxu0 0.0
        %1364 = vmatpush1.msra.mxu0 0.0
        %1365 = vmatprep.subr.mxu0 0.0
        %1366 = vmatpush1.msra.mxu0 0.0
        %1367 = vmatprep.subr.mxu0 0.0
        %1368 = vmatpush1.msra.mxu0 0.0
        %1369 = vmatprep.subr.mxu0 0.0
        %1370 = vmatpush1.msra.mxu0 0.0
        %1371 = vmatprep.mubr.f32.mxu0 0.0
        %1372 = vmatmul.mubr.f32.gmra.mrb[0].mxu0 %v1296
        %v1373 = vpop.f32.mrb[0].mxu0
        %v1374 = vadd.f32 0.0, %v1373
        %v1375 = vpop.f32.mrb[0].mxu0
        %1376 = vmatprep.mubr.f32.mxu0 0.0
        %1377 = vmatmul.mubr.f32.gmra.mrb[0].mxu0 %v1299
        %v1378 = vpop.f32.mrb[0].mxu0
        %v1379 = vadd.f32 0.0, %v1378
        %v1380 = vpop.f32.mrb[0].mxu0
        %1381 = vmatprep.mubr.f32.mxu0 0.0
        %1382 = vmatmul.mubr.f32.gmra.mrb[0].mxu0 %v1302
        %v1383 = vpop.f32.mrb[0].mxu0
        %v1384 = vadd.f32 0.0, %v1383
        %v1385 = vpop.f32.mrb[0].mxu0
        %1386 = vmatprep.mubr.f32.mxu0 0.0
        %1387 = vmatmul.mubr.f32.gmra.mrb[0].mxu0 %v1305
        %v1388 = vpop.f32.mrb[0].mxu0
        %v1389 = vadd.f32 0.0, %v1388
        %v1390 = vpop.f32.mrb[0].mxu0
        %1391 = vdwg.mxu0
        %v1393 = vsel %vm1102, %v1286, 0
        %v1396 = vsel %vm1102, %v1287, 0
        %v1399 = vsel %vm1102, %v1288, 0
        %v1402 = vsel %vm1102, %v1289, 0
        %1404 = vmatprep.subr.mxu0 0.0
        %1405 = vmatpush1.msra.mxu0 %v1284
        %1406 = vmatprep.subr.mxu0 0.0
        %1407 = vmatpush1.msra.mxu0 %v1285
        %1408 = vmatprep.subr.mxu0 0.0
        %1409 = vmatpush1.msra.mxu0 0.0
        %1410 = vmatprep.subr.mxu0 0.0
        %1411 = vmatpush1.msra.mxu0 0.0
        %1412 = vmatprep.subr.mxu0 0.0
        %1413 = vmatpush1.msra.mxu0 0.0
        %1414 = vmatprep.subr.mxu0 0.0
        %1415 = vmatpush1.msra.mxu0 0.0
        %1416 = vmatprep.subr.mxu0 0.0
        %1417 = vmatpush1.msra.mxu0 0.0
        %1418 = vmatprep.subr.mxu0 0.0
        %1419 = vmatpush1.msra.mxu0 0.0
        %1420 = vmatprep.subr.mxu0 0.0
        %1421 = vmatpush1.msra.mxu0 0.0
        %1422 = vmatprep.subr.mxu0 0.0
        %1423 = vmatpush1.msra.mxu0 0.0
        %1424 = vmatprep.subr.mxu0 0.0
        %1425 = vmatpush1.msra.mxu0 0.0
        %1426 = vmatprep.subr.mxu0 0.0
        %1427 = vmatpush1.msra.mxu0 0.0
        %1428 = vmatprep.subr.mxu0 0.0
        %1429 = vmatpush1.msra.mxu0 0.0
        %1430 = vmatprep.subr.mxu0 0.0
        %1431 = vmatpush1.msra.mxu0 0.0
        %1432 = vmatprep.subr.mxu0 0.0
        %1433 = vmatpush1.msra.mxu0 0.0
        %1434 = vmatprep.subr.mxu0 0.0
        %1435 = vmatpush1.msra.mxu0 0.0
        %1436 = vmatprep.subr.mxu0 0.0
        %1437 = vmatpush1.msra.mxu0 0.0
        %1438 = vmatprep.subr.mxu0 0.0
        %1439 = vmatpush1.msra.mxu0 0.0
        %1440 = vmatprep.subr.mxu0 0.0
        %1441 = vmatpush1.msra.mxu0 0.0
        %1442 = vmatprep.subr.mxu0 0.0
        %1443 = vmatpush1.msra.mxu0 0.0
        %1444 = vmatprep.subr.mxu0 0.0
        %1445 = vmatpush1.msra.mxu0 0.0
        %1446 = vmatprep.subr.mxu0 0.0
        %1447 = vmatpush1.msra.mxu0 0.0
        %1448 = vmatprep.subr.mxu0 0.0
        %1449 = vmatpush1.msra.mxu0 0.0
        %1450 = vmatprep.subr.mxu0 0.0
        %1451 = vmatpush1.msra.mxu0 0.0
        %1452 = vmatprep.subr.mxu0 0.0
        %1453 = vmatpush1.msra.mxu0 0.0
        %1454 = vmatprep.subr.mxu0 0.0
        %1455 = vmatpush1.msra.mxu0 0.0
        %1456 = vmatprep.subr.mxu0 0.0
        %1457 = vmatpush1.msra.mxu0 0.0
        %1458 = vmatprep.subr.mxu0 0.0
        %1459 = vmatpush1.msra.mxu0 0.0
        %1460 = vmatprep.subr.mxu0 0.0
        %1461 = vmatpush1.msra.mxu0 0.0
        %1462 = vmatprep.subr.mxu0 0.0
        %1463 = vmatpush1.msra.mxu0 0.0
        %1464 = vmatprep.subr.mxu0 0.0
        %1465 = vmatpush1.msra.mxu0 0.0
        %1466 = vmatprep.subr.mxu0 0.0
        %1467 = vmatpush1.msra.mxu0 0.0
        %1468 = vmatprep.mubr.f32.mxu0 0.0
        %1469 = vmatmul.mubr.f32.gmra.mrb[0].mxu0 %v1393
        %v1470 = vpop.f32.mrb[0].mxu0
        %v1471 = vadd.f32 %v1374, %v1470
        %v1472 = vpop.f32.mrb[0].mxu0
        %1473 = vmatprep.mubr.f32.mxu0 0.0
        %1474 = vmatmul.mubr.f32.gmra.mrb[0].mxu0 %v1396
        %v1475 = vpop.f32.mrb[0].mxu0
        %v1476 = vadd.f32 %v1379, %v1475
        %v1477 = vpop.f32.mrb[0].mxu0
        %1478 = vmatprep.mubr.f32.mxu0 0.0
        %1479 = vmatmul.mubr.f32.gmra.mrb[0].mxu0 %v1399
        %v1480 = vpop.f32.mrb[0].mxu0
        %v1481 = vadd.f32 %v1384, %v1480
        %v1482 = vpop.f32.mrb[0].mxu0
        %1483 = vmatprep.mubr.f32.mxu0 0.0
        %1484 = vmatmul.mubr.f32.gmra.mrb[0].mxu0 %v1402
        %v1485 = vpop.f32.mrb[0].mxu0
        %v1486 = vadd.f32 %v1389, %v1485
        %v1487 = vpop.f32.mrb[0].mxu0
        %1488 = vdwg.mxu0
        %v1489 = vld [vmem:[%s14] sm:$0xff]
        %v1490 = vld [vmem:[%s14 + $0x8] sm:$0xff]
        %v1491 = vld [vmem:[%s14 + $0x10] sm:$0xff]
        %v1492 = vld [vmem:[%s14 + $0x18] sm:$0xff]
        %1494 = vset.pattern.permute.xlu0 0
        %1495 = vperm.xlu0 %1494, %v1489
        %v1496 = vpop.permute.xlu0 %1495
        %1499 = vset.pattern.permute.xlu0 0
        %1500 = vperm.xlu0 %1499, %v1490
        %v1501 = vpop.permute.xlu0 %1500
        %1504 = vset.pattern.permute.xlu0 0
        %1505 = vperm.xlu0 %1504, %v1491
        %v1506 = vpop.permute.xlu0 %1505
        %1509 = vset.pattern.permute.xlu0 0
        %1510 = vperm.xlu0 %1509, %v1492
        %v1511 = vpop.permute.xlu0 %1510
        %v1513 = vadd.f32 %v1471, %v1496
        %v1514 = vadd.f32 %v1476, %v1501
        %v1515 = vadd.f32 %v1481, %v1506
        %v1516 = vadd.f32 %v1486, %v1511
        %v1517 = vmax.f32 %v1513, 0.0
        %v1518 = vmax.f32 %v1514, 0.0
        %v1519 = vmax.f32 %v1515, 0.0
        %v1520 = vmax.f32 %v1516, 0.0
        %v1521 = vld [vmem:[%s15] sm:$0xff]
        %v1522 = vld [vmem:[%s16] sm:$0xff]
        %1524 = vset.pattern.permute.xlu0 0
        %1525 = vperm.xlu0 %1524, %v1522
        %v1526 = vpop.permute.xlu0 %1525
        %vm1528 = vcmask 261120
        %v1530 = vsel %vm1528, %v1521, 0
        %1532 = vmatprep.subr.mxu0 0.0
        %1533 = vmatpush1.msra.mxu0 %v1517
        %1534 = vmatprep.subr.mxu0 0.0
        %1535 = vmatpush1.msra.mxu0 %v1518
        %1536 = vmatprep.subr.mxu0 0.0
        %1537 = vmatpush1.msra.mxu0 %v1519
        %1538 = vmatprep.subr.mxu0 0.0
        %1539 = vmatpush1.msra.mxu0 %v1520
        %1540 = vmatprep.subr.mxu0 0.0
        %1541 = vmatpush1.msra.mxu0 0.0
        %1542 = vmatprep.subr.mxu0 0.0
        %1543 = vmatpush1.msra.mxu0 0.0
        %1544 = vmatprep.subr.mxu0 0.0
        %1545 = vmatpush1.msra.mxu0 0.0
        %1546 = vmatprep.subr.mxu0 0.0
        %1547 = vmatpush1.msra.mxu0 0.0
        %1548 = vmatprep.subr.mxu0 0.0
        %1549 = vmatpush1.msra.mxu0 0.0
        %1550 = vmatprep.subr.mxu0 0.0
        %1551 = vmatpush1.msra.mxu0 0.0
        %1552 = vmatprep.subr.mxu0 0.0
        %1553 = vmatpush1.msra.mxu0 0.0
        %1554 = vmatprep.subr.mxu0 0.0
        %1555 = vmatpush1.msra.mxu0 0.0
        %1556 = vmatprep.subr.mxu0 0.0
        %1557 = vmatpush1.msra.mxu0 0.0
        %1558 = vmatprep.subr.mxu0 0.0
        %1559 = vmatpush1.msra.mxu0 0.0
        %1560 = vmatprep.subr.mxu0 0.0
        %1561 = vmatpush1.msra.mxu0 0.0
        %1562 = vmatprep.subr.mxu0 0.0
        %1563 = vmatpush1.msra.mxu0 0.0
        %1564 = vmatprep.subr.mxu0 0.0
        %1565 = vmatpush1.msra.mxu0 0.0
        %1566 = vmatprep.subr.mxu0 0.0
        %1567 = vmatpush1.msra.mxu0 0.0
        %1568 = vmatprep.subr.mxu0 0.0
        %1569 = vmatpush1.msra.mxu0 0.0
        %1570 = vmatprep.subr.mxu0 0.0
        %1571 = vmatpush1.msra.mxu0 0.0
        %1572 = vmatprep.subr.mxu0 0.0
        %1573 = vmatpush1.msra.mxu0 0.0
        %1574 = vmatprep.subr.mxu0 0.0
        %1575 = vmatpush1.msra.mxu0 0.0
        %1576 = vmatprep.subr.mxu0 0.0
        %1577 = vmatpush1.msra.mxu0 0.0
        %1578 = vmatprep.subr.mxu0 0.0
        %1579 = vmatpush1.msra.mxu0 0.0
        %1580 = vmatprep.subr.mxu0 0.0
        %1581 = vmatpush1.msra.mxu0 0.0
        %1582 = vmatprep.subr.mxu0 0.0
        %1583 = vmatpush1.msra.mxu0 0.0
        %1584 = vmatprep.subr.mxu0 0.0
        %1585 = vmatpush1.msra.mxu0 0.0
        %1586 = vmatprep.subr.mxu0 0.0
        %1587 = vmatpush1.msra.mxu0 0.0
        %1588 = vmatprep.subr.mxu0 0.0
        %1589 = vmatpush1.msra.mxu0 0.0
        %1590 = vmatprep.subr.mxu0 0.0
        %1591 = vmatpush1.msra.mxu0 0.0
        %1592 = vmatprep.subr.mxu0 0.0
        %1593 = vmatpush1.msra.mxu0 0.0
        %1594 = vmatprep.subr.mxu0 0.0
        %1595 = vmatpush1.msra.mxu0 0.0
        %1596 = vmatprep.mubr.f32.mxu0 0.0
        %1597 = vmatmul.mubr.f32.gmra.mrb[0].mxu0 %v1530
        %v1598 = vpop.f32.mrb[0].mxu0
        %v1599 = vadd.f32 %v1526, %v1598
        %v1600 = vpop.f32.mrb[0].mxu0
        %1601 = vdwg.mxu0
        %1602 = vst.msk [vmem:[%s17] sm:$0xff] %vm644, %v1599
      $region96: #{mpnn_layer.1} parent=87 // pred_fallthru
        _
      %s1603 = smul.u32 2, %s30
      %p1604 = scmp.lt.s32.totalorder %s1603, 3
      %s1605 = scalar_select %p1604, %s1603, 3
      %s1606 = smul.addr %s1605, 8
      %s1607 = scalar_lea.vmem %s18, %s1606
      // Predicated region
      $region97: #{mpnn_layer.1} parent=87 // pred_check
        %p1608 = pneg %p415
      $region98: #{mpnn_layer.1} parent=87 // pred_check_branch
        %1610 = sbr.rel (%p1608) target = $region100
      $region99: #{mpnn_layer.1} parent=87 // pred_region
        _
      $region100: #{mpnn_layer.1} parent=87 // pred_fallthru
        _
      // Predicated region
      $region101: #{mpnn_layer.1} parent=87 // pred_check
        %p1611 = pneg %p441
      $region102: #{mpnn_layer.1} parent=87 // pred_check_branch
        %1613 = sbr.rel (%p1611) target = $region104
      $region103: #{mpnn_layer.1} parent=87 // pred_region
        %s1614 = smul.u32 2, %s30
      $region104: #{mpnn_layer.1} parent=87 // pred_fallthru
        _
      // Predicated region
      $region105: #{mpnn_layer.1} parent=87 // pred_check
        %p1615 = pneg %p415
      $region106: #{mpnn_layer.1} parent=87 // pred_check_branch
        %1617 = sbr.rel (%p1615) target = $region108
      $region107: #{mpnn_layer.1} parent=87 // pred_region
        _
      $region108: #{mpnn_layer.1} parent=87 // pred_fallthru
        _
    $region88: #{mpnn_layer.1} parent=5 // pred_fallthru
      _
    %p1618 = scmp.le.s32.totalorder 2, %s25
    // Predicated region
    $region109: #{mpnn_layer.1} parent=5 // pred_check
      %p1619 = pneg %p1618
    $region110: #{mpnn_layer.1} parent=5 // pred_check_branch
      %1621 = sbr.rel (%p1619) target = $region112
    $region111: #{mpnn_layer.1} parent=5 // pred_region
      %s1622 = ssub.s32 %s25, 2
      // Predicated region
      $region113: #{mpnn_layer.1} parent=111 // pred_check
        %p1623 = pneg %p447
      $region114: #{mpnn_layer.1} parent=111 // pred_check_branch
        %1625 = sbr.rel (%p1623) target = $region116
      $region115: #{mpnn_layer.1} parent=111 // pred_region
        %s1626 = smul.u32 2, %s31
        %p1627 = scmp.lt.s32.totalorder %s1626, 3
        %s1628 = scalar_select %p1627, %s1626, 3
        %s1629 = smul.addr %s1628, 8
        %s1630 = scalar_lea.vmem %s18, %s1629
      $region116: #{mpnn_layer.1} parent=111 // pred_fallthru
        _
    $region112: #{mpnn_layer.1} parent=5 // pred_fallthru
      _
  $region6: #{mpnn_layer.1} parent=0 // loop_footer
    %s29 = sadd.s32 1, %s25
  $region7: #{mpnn_layer.1} parent=0 // loop_footer_branch
    %24 = sbr.rel target = $region3
  $region8: #{mpnn_layer.1} parent=0 // loop_exit
    _

</llo_original>
